<compile_context>
chip_gen: v7x
topology: tpu7x:2x2x1
jax: 0.10.0
libtpu: 0.0.40
codegen_flags: <defaults>
</compile_context>

<pallas_src>
import jax
import jax.numpy as jnp
from jax.experimental import pallas as pl
from jax.experimental.pallas import tpu as pltpu

# Logical (PyTorch) feature dims.
D_IN, D_HID, D_LAT = 784, 300, 32
# Lane-padded hidden/latent dims (multiples of 128) seen by the kernel.
D_HID_P, D_LAT_P = 384, 128


def _round_up(n, m):
    return ((n + m - 1) // m) * m


def sparse_ae_kernel(x_ref,
                     w1_ref, b1_ref,
                     w2_ref, b2_ref,
                     w3_ref, b3_ref,
                     w4_ref, b4_ref,
                     enc_ref, dec_ref):
    # x arrives already in bf16 (MXU-native operand, half the HBM read bytes).
    x = x_ref[...]                                                     # (TB, 784) bf16

    # encoder: Linear(784,300) + ReLU   (hidden padded to 384)
    h1 = jnp.dot(x, w1_ref[...], preferred_element_type=jnp.float32) + b1_ref[...]
    h1 = jnp.maximum(h1, 0.0)

    # encoder: Linear(300,32) + ReLU    (latent padded to 128)
    enc = jnp.dot(h1.astype(jnp.bfloat16), w2_ref[...],
                  preferred_element_type=jnp.float32) + b2_ref[...]
    enc = jnp.maximum(enc, 0.0)

    # decoder: Linear(32,300) + ReLU
    h3 = jnp.dot(enc.astype(jnp.bfloat16), w3_ref[...],
                 preferred_element_type=jnp.float32) + b3_ref[...]
    h3 = jnp.maximum(h3, 0.0)

    # decoder: Linear(300,784) + Sigmoid  (output kept at native 784 width)
    logits = jnp.dot(h3.astype(jnp.bfloat16), w4_ref[...],
                     preferred_element_type=jnp.float32) + b4_ref[...]
    dec = jax.nn.sigmoid(logits)

    enc_ref[...] = enc.astype(enc_ref.dtype)   # lane-dense (TB, 128) bf16 store
    dec_ref[...] = dec.astype(dec_ref.dtype)   # (TB, 784) bf16 store


def _pick_batch_tile(B, tile_b):
    # bf16 activation blocks need a sublane multiple of 16.
    if B <= 32:
        return _round_up(B, 16)
    # Aim for >= 2 grid steps so the "parallel" batch axis can shard across
    # both TensorCores on v7x, capped at tile_b rows per step.
    return min(tile_b, _round_up(pl.cdiv(B, 2), 16))


def sparse_ae_forward(x, padded_params, *, training=True, tile_b=512):
    """x: (B, 784).  padded_params: dict from prepare_params().

    Returns bf16 outputs (encode, decode) in training mode, decode in eval
    mode, matching the PyTorch module's forward semantics.
    """
    B = x.shape[0]
    tb = _pick_batch_tile(B, tile_b)
    b_pad = _round_up(B, tb)
    grid = (b_pad // tb,)

    # Stream the input in bf16; pad only the batch axis (and only if needed).
    x_bf16 = x.astype(jnp.bfloat16)
    if b_pad != B:
        x_in = jnp.zeros((b_pad, D_IN), jnp.bfloat16).at[:B].set(x_bf16)
    else:
        x_in = x_bf16

    w1, b1 = padded_params["w1"], padded_params["b1"]
    w2, b2 = padded_params["w2"], padded_params["b2"]
    w3, b3 = padded_params["w3"], padded_params["b3"]
    w4, b4 = padded_params["w4"], padded_params["b4"]

    # Advisory cost estimate for XLA scheduling around the custom call.
    flops = 2 * b_pad * (D_IN * D_HID_P + D_HID_P * D_LAT_P
                         + D_LAT_P * D_HID_P + D_HID_P * D_IN)
    weight_bytes = sum(int(v.size) * int(v.dtype.itemsize)
                       for v in padded_params.values())
    bytes_accessed = (weight_bytes
                      + b_pad * D_IN * 2          # x read (bf16)
                      + b_pad * D_IN * 2          # dec write (bf16)
                      + b_pad * D_LAT_P * 2)      # enc write (bf16)

    def resident(shape):
        # Whole-array block whose index never changes -> stays VMEM-resident
        # across the entire batch grid (weights are DMA'd from HBM once).
        return pl.BlockSpec(shape, lambda i: (0, 0))

    enc_p, dec_p = pl.pallas_call(
        sparse_ae_kernel,
        out_shape=(
            jax.ShapeDtypeStruct((b_pad, D_LAT_P), jnp.bfloat16),  # encode (padded)
            jax.ShapeDtypeStruct((b_pad, D_IN), jnp.bfloat16),     # decode (784 wide)
        ),
        grid=grid,
        in_specs=[
            pl.BlockSpec((tb, D_IN), lambda i: (i, 0)),            # x streamed per tile
            resident((D_IN, D_HID_P)), resident((1, D_HID_P)),     # w1, b1
            resident((D_HID_P, D_LAT_P)), resident((1, D_LAT_P)),  # w2, b2
            resident((D_LAT_P, D_HID_P)), resident((1, D_HID_P)),  # w3, b3
            resident((D_HID_P, D_IN)), resident((1, D_IN)),        # w4, b4
        ],
        out_specs=(
            pl.BlockSpec((tb, D_LAT_P), lambda i: (i, 0)),
            pl.BlockSpec((tb, D_IN), lambda i: (i, 0)),
        ),
        compiler_params=pltpu.CompilerParams(
            dimension_semantics=("parallel",),    # batch axis -> both TCs on v7x
            vmem_limit_bytes=48 * 1024 * 1024,    # safe on v5e/v6e/v7x, fits tb<=1024
        ),
        cost_estimate=pl.CostEstimate(
            flops=flops,
            transcendentals=b_pad * D_IN,         # sigmoid exps
            bytes_accessed=bytes_accessed,
        ),
    )(x_in, w1, b1, w2, b2, w3, b3, w4, b4)

    enc = enc_p[:B, :D_LAT]                       # tiny (B, 32) slice
    dec = dec_p[:B] if b_pad != B else dec_p      # no slice pass when aligned
    if training:
        return enc, dec      # matches nn.Module in training mode
    return dec               # matches eval mode


def init_params(key):
    """Deterministic synthetic parameters with the PyTorch shapes
    (nn.Linear weight is (out, in); we store the transpose (in, out))."""
    dims = [(D_IN, D_HID), (D_HID, D_LAT), (D_LAT, D_HID), (D_HID, D_IN)]
    params = {}
    keys = jax.random.split(key, len(dims) * 2)
    for i, (fan_in, fan_out) in enumerate(dims):
        bound = 1.0 / (fan_in ** 0.5)
        params[f"w{i + 1}_t"] = jax.random.uniform(
            keys[2 * i], (fan_in, fan_out),
            minval=-bound, maxval=bound, dtype=jnp.float32)
        params[f"b{i + 1}"] = jax.random.uniform(
            keys[2 * i + 1], (1, fan_out),
            minval=-bound, maxval=bound, dtype=jnp.float32)
    return params


def prepare_params(params):
    """Zero-pad hidden/latent dims to lane multiples; weights -> bf16,
    biases stay f32.  Input (784) and output (784) dims stay unpadded."""
    def pad_w(w, pin, pout):
        wp = jnp.zeros((pin, pout), jnp.float32)
        wp = wp.at[:w.shape[0], :w.shape[1]].set(w)
        return wp.astype(jnp.bfloat16)            # exact for the zero padding

    def pad_b(b, pout):
        return jnp.zeros((1, pout), jnp.float32).at[:, :b.shape[1]].set(b)

    return {
        "w1": pad_w(params["w1_t"], D_IN, D_HID_P),    # (784, 384)
        "b1": pad_b(params["b1"], D_HID_P),
        "w2": pad_w(params["w2_t"], D_HID_P, D_LAT_P),  # (384, 128)
        "b2": pad_b(params["b2"], D_LAT_P),
        "w3": pad_w(params["w3_t"], D_LAT_P, D_HID_P),  # (128, 384)
        "b3": pad_b(params["b3"], D_HID_P),
        "w4": pad_w(params["w4_t"], D_HID_P, D_IN),     # (384, 784) - no col pad
        "b4": pad_b(params["b4"], D_IN),                # (1, 784)
    }


def _ref_forward_bf16(x, params):
    """Plain-JAX reference with the same bf16-operand / f32-accum recipe."""
    def lin(a, w, b):
        return jnp.dot(a.astype(jnp.bfloat16), w.astype(jnp.bfloat16),
                       preferred_element_type=jnp.float32) + b
    h1 = jnp.maximum(lin(x, params["w1_t"], params["b1"]), 0.0)
    e = jnp.maximum(lin(h1, params["w2_t"], params["b2"]), 0.0)
    h3 = jnp.maximum(lin(e, params["w3_t"], params["b3"]), 0.0)
    d = jax.nn.sigmoid(lin(h3, params["w4_t"], params["b4"]))
    return e, d


def _check(x, params, padded_params):
    B = x.shape[0]
    enc, dec = sparse_ae_forward(x, padded_params, training=True)
    jax.block_until_ready((enc, dec))

    assert enc.shape == (B, D_LAT) and dec.shape == (B, D_IN)
    assert bool(jnp.all(enc.astype(jnp.float32) >= 0.0))      # ReLU output
    d32 = dec.astype(jnp.float32)
    assert bool(jnp.all((d32 >= 0.0) & (d32 <= 1.0)))         # Sigmoid output

    # Cross-check against a plain-JAX reference (outputs are bf16 -> ~0.4% rel).
    e_ref, d_ref = _ref_forward_bf16(x, params)
    assert jnp.allclose(enc.astype(jnp.float32), e_ref, atol=2e-2, rtol=2e-2)
    assert jnp.allclose(d32, d_ref, atol=2e-2, rtol=2e-2)

    # Eval-mode path (decode only), as in the PyTorch module.
    dec_eval = sparse_ae_forward(x, padded_params, training=False)
    jax.block_until_ready(dec_eval)
    assert dec_eval.shape == (B, D_IN)


if __name__ == "__main__":
    key = jax.random.PRNGKey(0)
    k_param, k_x1, k_x2 = jax.random.split(key, 3)

    params = init_params(k_param)
    padded_params = prepare_params(params)

    # Small batch (single grid step, padded 8 -> 16 rows).
    x_small = jax.random.uniform(k_x1, (8, D_IN), dtype=jnp.float32)
    _check(x_small, params, padded_params)

    # Larger batch exercising the multi-step streaming path (tb=48, grid=(2,),
    # no batch padding, no wrapper pad/slice passes on the decode output).
    x_big = jax.random.uniform(k_x2, (96, D_IN), dtype=jnp.float32)
    _check(x_big, params, padded_params)

    print("KERNEL_OK")
</pallas_src>

<mosaic_0001>
module attributes {stable_mosaic.version = 11 : i64} {
  func.func @sparse_ae_kernel(%arg0: i32, %arg1: memref<16x784xbf16, #tpu.memory_space<vmem>>, %arg2: memref<784x384xbf16, #tpu.memory_space<vmem>>, %arg3: memref<1x384xf32, #tpu.memory_space<vmem>>, %arg4: memref<384x128xbf16, #tpu.memory_space<vmem>>, %arg5: memref<1x128xf32, #tpu.memory_space<vmem>>, %arg6: memref<128x384xbf16, #tpu.memory_space<vmem>>, %arg7: memref<1x384xf32, #tpu.memory_space<vmem>>, %arg8: memref<384x784xbf16, #tpu.memory_space<vmem>>, %arg9: memref<1x784xf32, #tpu.memory_space<vmem>>, %arg10: memref<16x128xbf16, #tpu.memory_space<vmem>>, %arg11: memref<16x784xbf16, #tpu.memory_space<vmem>>) attributes {dimension_semantics = [#tpu.dimension_semantics<parallel>], iteration_bounds = array<i64: 1>, scalar_prefetch = 0 : i64, scratch_operands = 0 : i64, tpu.core_type = #tpu.core_type<tc>, window_params = [{transform_indices = @transform_0, window_bounds = array<i64: 16, 784>}, {pipeline_mode = #tpu.pipeline_mode<synchronous>, transform_indices = @transform_1, window_bounds = array<i64: 784, 384>}, {pipeline_mode = #tpu.pipeline_mode<synchronous>, transform_indices = @transform_2, window_bounds = array<i64: 1, 384>}, {pipeline_mode = #tpu.pipeline_mode<synchronous>, transform_indices = @transform_3, window_bounds = array<i64: 384, 128>}, {pipeline_mode = #tpu.pipeline_mode<synchronous>, transform_indices = @transform_4, window_bounds = array<i64: 1, 128>}, {pipeline_mode = #tpu.pipeline_mode<synchronous>, transform_indices = @transform_5, window_bounds = array<i64: 128, 384>}, {pipeline_mode = #tpu.pipeline_mode<synchronous>, transform_indices = @transform_6, window_bounds = array<i64: 1, 384>}, {pipeline_mode = #tpu.pipeline_mode<synchronous>, transform_indices = @transform_7, window_bounds = array<i64: 384, 784>}, {pipeline_mode = #tpu.pipeline_mode<synchronous>, transform_indices = @transform_8, window_bounds = array<i64: 1, 784>}, {transform_indices = @transform_9, window_bounds = array<i64: 16, 128>}, {transform_indices = @transform_10, window_bounds = array<i64: 16, 784>}]} {
    %c0 = arith.constant 0 : index
    %c0_0 = arith.constant 0 : index
    %0 = vector.load %arg1[%c0, %c0_0] : memref<16x784xbf16, #tpu.memory_space<vmem>>, vector<16x784xbf16>
    %c0_1 = arith.constant 0 : index
    %c0_2 = arith.constant 0 : index
    %1 = vector.load %arg2[%c0_1, %c0_2] : memref<784x384xbf16, #tpu.memory_space<vmem>>, vector<784x384xbf16>
    %cst = arith.constant dense<0.000000e+00> : vector<16x384xf32>
    %2 = tpu.matmul %0, %1, %cst {dimension_numbers = #tpu.dot_dimension_numbers<[1], [0], [0], [1], [0, 0, 1, 1], [], []>} : vector<16x784xbf16>, vector<784x384xbf16>, vector<16x384xf32> -> vector<16x384xf32>
    %c0_3 = arith.constant 0 : index
    %c0_4 = arith.constant 0 : index
    %3 = vector.load %arg3[%c0_3, %c0_4] : memref<1x384xf32, #tpu.memory_space<vmem>>, vector<1x384xf32>
    %4 = vector.broadcast %3 : vector<1x384xf32> to vector<16x384xf32>
    %5 = arith.addf %2, %4 : vector<16x384xf32>
    %cst_5 = arith.constant 0.000000e+00 : f32
    %6 = vector.broadcast %cst_5 : f32 to vector<16x384xf32>
    %7 = arith.maximumf %5, %6 : vector<16x384xf32>
    %8 = arith.truncf %7 : vector<16x384xf32> to vector<16x384xbf16>
    %c0_6 = arith.constant 0 : index
    %c0_7 = arith.constant 0 : index
    %9 = vector.load %arg4[%c0_6, %c0_7] : memref<384x128xbf16, #tpu.memory_space<vmem>>, vector<384x128xbf16>
    %cst_8 = arith.constant dense<0.000000e+00> : vector<16x128xf32>
    %10 = tpu.matmul %8, %9, %cst_8 {dimension_numbers = #tpu.dot_dimension_numbers<[1], [0], [0], [1], [0, 0, 1, 1], [], []>} : vector<16x384xbf16>, vector<384x128xbf16>, vector<16x128xf32> -> vector<16x128xf32>
    %c0_9 = arith.constant 0 : index
    %c0_10 = arith.constant 0 : index
    %11 = vector.load %arg5[%c0_9, %c0_10] : memref<1x128xf32, #tpu.memory_space<vmem>>, vector<1x128xf32>
    %12 = vector.broadcast %11 : vector<1x128xf32> to vector<16x128xf32>
    %13 = arith.addf %10, %12 : vector<16x128xf32>
    %cst_11 = arith.constant 0.000000e+00 : f32
    %14 = vector.broadcast %cst_11 : f32 to vector<16x128xf32>
    %15 = arith.maximumf %13, %14 : vector<16x128xf32>
    %16 = arith.truncf %15 : vector<16x128xf32> to vector<16x128xbf16>
    %c0_12 = arith.constant 0 : index
    %c0_13 = arith.constant 0 : index
    %17 = vector.load %arg6[%c0_12, %c0_13] : memref<128x384xbf16, #tpu.memory_space<vmem>>, vector<128x384xbf16>
    %cst_14 = arith.constant dense<0.000000e+00> : vector<16x384xf32>
    %18 = tpu.matmul %16, %17, %cst_14 {dimension_numbers = #tpu.dot_dimension_numbers<[1], [0], [0], [1], [0, 0, 1, 1], [], []>} : vector<16x128xbf16>, vector<128x384xbf16>, vector<16x384xf32> -> vector<16x384xf32>
    %c0_15 = arith.constant 0 : index
    %c0_16 = arith.constant 0 : index
    %19 = vector.load %arg7[%c0_15, %c0_16] : memref<1x384xf32, #tpu.memory_space<vmem>>, vector<1x384xf32>
    %20 = vector.broadcast %19 : vector<1x384xf32> to vector<16x384xf32>
    %21 = arith.addf %18, %20 : vector<16x384xf32>
    %cst_17 = arith.constant 0.000000e+00 : f32
    %22 = vector.broadcast %cst_17 : f32 to vector<16x384xf32>
    %23 = arith.maximumf %21, %22 : vector<16x384xf32>
    %24 = arith.truncf %23 : vector<16x384xf32> to vector<16x384xbf16>
    %c0_18 = arith.constant 0 : index
    %c0_19 = arith.constant 0 : index
    %25 = vector.load %arg8[%c0_18, %c0_19] : memref<384x784xbf16, #tpu.memory_space<vmem>>, vector<384x784xbf16>
    %cst_20 = arith.constant dense<0.000000e+00> : vector<16x784xf32>
    %26 = tpu.matmul %24, %25, %cst_20 {dimension_numbers = #tpu.dot_dimension_numbers<[1], [0], [0], [1], [0, 0, 1, 1], [], []>} : vector<16x384xbf16>, vector<384x784xbf16>, vector<16x784xf32> -> vector<16x784xf32>
    %c0_21 = arith.constant 0 : index
    %c0_22 = arith.constant 0 : index
    %27 = vector.load %arg9[%c0_21, %c0_22] : memref<1x784xf32, #tpu.memory_space<vmem>>, vector<1x784xf32>
    %28 = vector.broadcast %27 : vector<1x784xf32> to vector<16x784xf32>
    %29 = arith.addf %26, %28 : vector<16x784xf32>
    %30 = arith.negf %29 : vector<16x784xf32>
    %31 = math.exp %30 : vector<16x784xf32>
    %cst_23 = arith.constant 1.000000e+00 : f32
    %32 = vector.broadcast %cst_23 : f32 to vector<16x784xf32>
    %33 = arith.addf %32, %31 : vector<16x784xf32>
    %34 = arith.divf %32, %33 : vector<16x784xf32>
    %35 = arith.truncf %15 : vector<16x128xf32> to vector<16x128xbf16>
    %c0_24 = arith.constant 0 : index
    %c0_25 = arith.constant 0 : index
    %36 = vector.load %arg10[%c0_24, %c0_25] : memref<16x128xbf16, #tpu.memory_space<vmem>>, vector<16x128xbf16>
    tpu.vector_store %arg10[%c0_24, %c0_25], %35 {strides = array<i32>} : memref<16x128xbf16, #tpu.memory_space<vmem>>, vector<16x128xbf16>,
    %37 = arith.truncf %34 : vector<16x784xf32> to vector<16x784xbf16>
    %c0_26 = arith.constant 0 : index
    %c0_27 = arith.constant 0 : index
    %38 = vector.load %arg11[%c0_26, %c0_27] : memref<16x784xbf16, #tpu.memory_space<vmem>>, vector<16x784xbf16>
    tpu.vector_store %arg11[%c0_26, %c0_27], %37 {strides = array<i32>} : memref<16x784xbf16, #tpu.memory_space<vmem>>, vector<16x784xbf16>,
    return
  }
  func.func @transform_0(%arg0: i32) -> (i32, i32) {
    %c0_i32 = arith.constant 0 : i32
    %c0_i32_0 = arith.constant 0 : i32
    return %arg0, %c0_i32 : i32, i32
  }
  func.func @transform_1(%arg0: i32) -> (i32, i32) {
    %c0_i32 = arith.constant 0 : i32
    %c0_i32_0 = arith.constant 0 : i32
    %c0_i32_1 = arith.constant 0 : i32
    return %c0_i32, %c0_i32_0 : i32, i32
  }
  func.func @transform_2(%arg0: i32) -> (i32, i32) {
    %c0_i32 = arith.constant 0 : i32
    %c0_i32_0 = arith.constant 0 : i32
    %c0_i32_1 = arith.constant 0 : i32
    return %c0_i32, %c0_i32_0 : i32, i32
  }
  func.func @transform_3(%arg0: i32) -> (i32, i32) {
    %c0_i32 = arith.constant 0 : i32
    %c0_i32_0 = arith.constant 0 : i32
    %c0_i32_1 = arith.constant 0 : i32
    return %c0_i32, %c0_i32_0 : i32, i32
  }
  func.func @transform_4(%arg0: i32) -> (i32, i32) {
    %c0_i32 = arith.constant 0 : i32
    %c0_i32_0 = arith.constant 0 : i32
    %c0_i32_1 = arith.constant 0 : i32
    return %c0_i32, %c0_i32_0 : i32, i32
  }
  func.func @transform_5(%arg0: i32) -> (i32, i32) {
    %c0_i32 = arith.constant 0 : i32
    %c0_i32_0 = arith.constant 0 : i32
    %c0_i32_1 = arith.constant 0 : i32
    return %c0_i32, %c0_i32_0 : i32, i32
  }
  func.func @transform_6(%arg0: i32) -> (i32, i32) {
    %c0_i32 = arith.constant 0 : i32
    %c0_i32_0 = arith.constant 0 : i32
    %c0_i32_1 = arith.constant 0 : i32
    return %c0_i32, %c0_i32_0 : i32, i32
  }
  func.func @transform_7(%arg0: i32) -> (i32, i32) {
    %c0_i32 = arith.constant 0 : i32
    %c0_i32_0 = arith.constant 0 : i32
    %c0_i32_1 = arith.constant 0 : i32
    return %c0_i32, %c0_i32_0 : i32, i32
  }
  func.func @transform_8(%arg0: i32) -> (i32, i32) {
    %c0_i32 = arith.constant 0 : i32
    %c0_i32_0 = arith.constant 0 : i32
    %c0_i32_1 = arith.constant 0 : i32
    return %c0_i32, %c0_i32_0 : i32, i32
  }
  func.func @transform_9(%arg0: i32) -> (i32, i32) {
    %c0_i32 = arith.constant 0 : i32
    %c0_i32_0 = arith.constant 0 : i32
    return %arg0, %c0_i32 : i32, i32
  }
  func.func @transform_10(%arg0: i32) -> (i32, i32) {
    %c0_i32 = arith.constant 0 : i32
    %c0_i32_0 = arith.constant 0 : i32
    return %arg0, %c0_i32 : i32, i32
  }
}

</mosaic_0001>

<llo_original>
// kernel: tpu_custom_call.1
$region0: #{tpu_custom_call.1}
  #allocation0 [shape = 'u32[]', space=smem, size = 0x4, offset = 0x4, fixed_abs, tag = 'smem constant byte address 0x4 - core index']
  #allocation1 [shape = 'u32[144,128]{1,0:T(1,128)}', space=vmem, size = 0x12000, scoped, tag = 'internal scratch']
  %s0 = inlined_call_operand.vmem [shape: bf16[16,784], index: 0, kind: input, shape index: {}]
  %s1 = inlined_call_operand.vmem [shape: bf16[784,384], index: 1, kind: input, shape index: {}]
  %s2 = inlined_call_operand.vmem [shape: f32[1,384], index: 2, kind: input, shape index: {}]
  %s3 = inlined_call_operand.vmem [shape: bf16[384,128], index: 3, kind: input, shape index: {}]
  %s4 = inlined_call_operand.vmem [shape: f32[1,128], index: 4, kind: input, shape index: {}]
  %s5 = inlined_call_operand.vmem [shape: bf16[128,384], index: 5, kind: input, shape index: {}]
  %s6 = inlined_call_operand.vmem [shape: f32[1,384], index: 6, kind: input, shape index: {}]
  %s7 = inlined_call_operand.vmem [shape: bf16[384,784], index: 7, kind: input, shape index: {}]
  %s8 = inlined_call_operand.vmem [shape: f32[1,784], index: 8, kind: input, shape index: {}]
  %s9 = inlined_call_operand.hbm [shape: bf16[16,128], index: 9, kind: output, shape index: {0}]
  %s10 = inlined_call_operand.hbm [shape: bf16[16,784], index: 10, kind: output, shape index: {1}]
  %11 = xla_tuple %s9, %s10
  %s12 = sld [smem:[#allocation0]]
  $region54: #{tpu_custom_call.1} parent=0
    _
  %s14 = ssub.s32 1, %s12
  %s15 = scalar_select 0, %s14, %s12
  $region1: #{tpu_custom_call.1} parent=0
    #allocation2 [shape = 'u8[4096]{0}', space=vmem, size = 0x1000, scoped, tag = 'output window, operand 0, single buffered']
    #allocation3 [shape = 's32[1]{0}', space=sflag, size = 0x4, scoped, tag = 'scoped memory for tpu_custom_call.1']
    #allocation4 [shape = 'u8[28672]{0}', space=vmem, size = 0x7000, scoped, tag = 'output window, operand 1, single buffered']
    #allocation5 [shape = 's32[1]{0}', space=sflag, size = 0x4, scoped, tag = 'scoped memory for tpu_custom_call.1']
    %16 = vsyncpa [#allocation3], 0
    %17 = vsyncpa [#allocation5], 0
    // Predicated region
    $region2: #{tpu_custom_call.1} parent=1 // pred_check
      _
    $region3: #{tpu_custom_call.1} parent=1 // pred_check_branch
      %19 = sbr.rel (0) target = $region5
    $region4: #{tpu_custom_call.1} parent=1 // pred_region
      _
    $region5: #{tpu_custom_call.1} parent=1 // pred_fallthru
      _
    // Predicated region
    $region6: #{tpu_custom_call.1} parent=1 // pred_check
      _
    $region7: #{tpu_custom_call.1} parent=1 // pred_check_branch
      %21 = sbr.rel (0) target = $region9
    $region8: #{tpu_custom_call.1} parent=1 // pred_region
      _
    $region9: #{tpu_custom_call.1} parent=1 // pred_fallthru
      _
    // Predicated region
    $region10: #{tpu_custom_call.1} parent=1 // pred_check
      _
    $region11: #{tpu_custom_call.1} parent=1 // pred_check_branch
      %23 = sbr.rel (0) target = $region13
    $region12: #{tpu_custom_call.1} parent=1 // pred_region
      _
    $region13: #{tpu_custom_call.1} parent=1 // pred_fallthru
      _
    // Predicated region
    $region14: #{tpu_custom_call.1} parent=1 // pred_check
      _
    $region15: #{tpu_custom_call.1} parent=1 // pred_check_branch
      %25 = sbr.rel (0) target = $region17
    $region16: #{tpu_custom_call.1} parent=1 // pred_region
      _
    $region17: #{tpu_custom_call.1} parent=1 // pred_fallthru
      _
    // Predicated region
    $region18: #{tpu_custom_call.1} parent=1 // pred_check
      _
    $region19: #{tpu_custom_call.1} parent=1 // pred_check_branch
      %27 = sbr.rel (0) target = $region21
    $region20: #{tpu_custom_call.1} parent=1 // pred_region
      _
    $region21: #{tpu_custom_call.1} parent=1 // pred_fallthru
      _
    // Predicated region
    $region22: #{tpu_custom_call.1} parent=1 // pred_check
      _
    $region23: #{tpu_custom_call.1} parent=1 // pred_check_branch
      %29 = sbr.rel (0) target = $region25
    $region24: #{tpu_custom_call.1} parent=1 // pred_region
      _
    $region25: #{tpu_custom_call.1} parent=1 // pred_fallthru
      _
    // Predicated region
    $region26: #{tpu_custom_call.1} parent=1 // pred_check
      _
    $region27: #{tpu_custom_call.1} parent=1 // pred_check_branch
      %31 = sbr.rel (0) target = $region29
    $region28: #{tpu_custom_call.1} parent=1 // pred_region
      _
    $region29: #{tpu_custom_call.1} parent=1 // pred_fallthru
      _
    // Predicated region
    $region30: #{tpu_custom_call.1} parent=1 // pred_check
      _
    $region31: #{tpu_custom_call.1} parent=1 // pred_check_branch
      %33 = sbr.rel (0) target = $region33
    $region32: #{tpu_custom_call.1} parent=1 // pred_region
      _
    $region33: #{tpu_custom_call.1} parent=1 // pred_fallthru
      _
    // Predicated region
    $region34: #{tpu_custom_call.1} parent=1 // pred_check
      _
    $region35: #{tpu_custom_call.1} parent=1 // pred_check_branch
      %35 = sbr.rel (0) target = $region37
    $region36: #{tpu_custom_call.1} parent=1 // pred_region
      _
    $region37: #{tpu_custom_call.1} parent=1 // pred_fallthru
      _
    %v37 = vld [vmem:[%s0] sm:$0xff]
    %v38 = vld [vmem:[%s0 + $0x8] sm:$0xff]
    %v39 = vld [vmem:[%s0 + $0x10] sm:$0xff]
    %v40 = vld [vmem:[%s0 + $0x18] sm:$0xf]
    %v41 = vld [vmem:[%s0 + $0x1c] sm:$0xff]
    %v42 = vld [vmem:[%s0 + $0x24] sm:$0xff]
    %v43 = vld [vmem:[%s0 + $0x2c] sm:$0xff]
    %v44 = vld [vmem:[%s0 + $0x34] sm:$0xf]
    %v45 = vld [vmem:[%s1] sm:$0xff]
    %v46 = vld [vmem:[%s1 + $0x8] sm:$0xf]
    %v47 = vld [vmem:[%s1 + $0xc] sm:$0xff]
    %v48 = vld [vmem:[%s1 + $0x14] sm:$0xf]
    %v49 = vld [vmem:[%s1 + $0x18] sm:$0xff]
    %v50 = vld [vmem:[%s1 + $0x20] sm:$0xf]
    %v51 = vld [vmem:[%s1 + $0x24] sm:$0xff]
    %v52 = vld [vmem:[%s1 + $0x2c] sm:$0xf]
    %v53 = vld [vmem:[%s1 + $0x30] sm:$0xff]
    %v54 = vld [vmem:[%s1 + $0x38] sm:$0xf]
    %v55 = vld [vmem:[%s1 + $0x3c] sm:$0xff]
    %v56 = vld [vmem:[%s1 + $0x44] sm:$0xf]
    %v57 = vld [vmem:[%s1 + $0x48] sm:$0xff]
    %v58 = vld [vmem:[%s1 + $0x50] sm:$0xf]
    %v59 = vld [vmem:[%s1 + $0x54] sm:$0xff]
    %v60 = vld [vmem:[%s1 + $0x5c] sm:$0xf]
    %v61 = vld [vmem:[%s1 + $0x60] sm:$0xff]
    %v62 = vld [vmem:[%s1 + $0x68] sm:$0xf]
    %v63 = vld [vmem:[%s1 + $0x6c] sm:$0xff]
    %v64 = vld [vmem:[%s1 + $0x74] sm:$0xf]
    %v65 = vld [vmem:[%s1 + $0x78] sm:$0xff]
    %v66 = vld [vmem:[%s1 + $0x80] sm:$0xf]
    %v67 = vld [vmem:[%s1 + $0x84] sm:$0xff]
    %v68 = vld [vmem:[%s1 + $0x8c] sm:$0xf]
    %v69 = vld [vmem:[%s1 + $0x90] sm:$0xff]
    %v70 = vld [vmem:[%s1 + $0x98] sm:$0xf]
    %v71 = vld [vmem:[%s1 + $0x9c] sm:$0xff]
    %v72 = vld [vmem:[%s1 + $0xa4] sm:$0xf]
    %v73 = vld [vmem:[%s1 + $0xa8] sm:$0xff]
    %v74 = vld [vmem:[%s1 + $0xb0] sm:$0xf]
    %v75 = vld [vmem:[%s1 + $0xb4] sm:$0xff]
    %v76 = vld [vmem:[%s1 + $0xbc] sm:$0xf]
    %v77 = vld [vmem:[%s1 + $0xc0] sm:$0xff]
    %v78 = vld [vmem:[%s1 + $0xc8] sm:$0xf]
    %v79 = vld [vmem:[%s1 + $0xcc] sm:$0xff]
    %v80 = vld [vmem:[%s1 + $0xd4] sm:$0xf]
    %v81 = vld [vmem:[%s1 + $0xd8] sm:$0xff]
    %v82 = vld [vmem:[%s1 + $0xe0] sm:$0xf]
    %v83 = vld [vmem:[%s1 + $0xe4] sm:$0xff]
    %v84 = vld [vmem:[%s1 + $0xec] sm:$0xf]
    %v85 = vld [vmem:[%s1 + $0xf0] sm:$0xff]
    %v86 = vld [vmem:[%s1 + $0xf8] sm:$0xf]
    %v87 = vld [vmem:[%s1 + $0xfc] sm:$0xff]
    %v88 = vld [vmem:[%s1 + $0x104] sm:$0xf]
    %v89 = vld [vmem:[%s1 + $0x108] sm:$0xff]
    %v90 = vld [vmem:[%s1 + $0x110] sm:$0xf]
    %v91 = vld [vmem:[%s1 + $0x114] sm:$0xff]
    %v92 = vld [vmem:[%s1 + $0x11c] sm:$0xf]
    %v93 = vld [vmem:[%s1 + $0x120] sm:$0xff]
    %v94 = vld [vmem:[%s1 + $0x128] sm:$0xf]
    %v95 = vld [vmem:[%s1 + $0x12c] sm:$0xff]
    %v96 = vld [vmem:[%s1 + $0x134] sm:$0xf]
    %v97 = vld [vmem:[%s1 + $0x138] sm:$0xff]
    %v98 = vld [vmem:[%s1 + $0x140] sm:$0xf]
    %v99 = vld [vmem:[%s1 + $0x144] sm:$0xff]
    %v100 = vld [vmem:[%s1 + $0x14c] sm:$0xf]
    %v101 = vld [vmem:[%s1 + $0x150] sm:$0xff]
    %v102 = vld [vmem:[%s1 + $0x158] sm:$0xf]
    %v103 = vld [vmem:[%s1 + $0x15c] sm:$0xff]
    %v104 = vld [vmem:[%s1 + $0x164] sm:$0xf]
    %v105 = vld [vmem:[%s1 + $0x168] sm:$0xff]
    %v106 = vld [vmem:[%s1 + $0x170] sm:$0xf]
    %v107 = vld [vmem:[%s1 + $0x174] sm:$0xff]
    %v108 = vld [vmem:[%s1 + $0x17c] sm:$0xf]
    %v109 = vld [vmem:[%s1 + $0x180] sm:$0xff]
    %v110 = vld [vmem:[%s1 + $0x188] sm:$0xf]
    %v111 = vld [vmem:[%s1 + $0x18c] sm:$0xff]
    %v112 = vld [vmem:[%s1 + $0x194] sm:$0xf]
    %v113 = vld [vmem:[%s1 + $0x198] sm:$0xff]
    %v114 = vld [vmem:[%s1 + $0x1a0] sm:$0xf]
    %v115 = vld [vmem:[%s1 + $0x1a4] sm:$0xff]
    %v116 = vld [vmem:[%s1 + $0x1ac] sm:$0xf]
    %v117 = vld [vmem:[%s1 + $0x1b0] sm:$0xff]
    %v118 = vld [vmem:[%s1 + $0x1b8] sm:$0xf]
    %v119 = vld [vmem:[%s1 + $0x1bc] sm:$0xff]
    %v120 = vld [vmem:[%s1 + $0x1c4] sm:$0xf]
    %v121 = vld [vmem:[%s1 + $0x1c8] sm:$0xff]
    %v122 = vld [vmem:[%s1 + $0x1d0] sm:$0xf]
    %v123 = vld [vmem:[%s1 + $0x1d4] sm:$0xff]
    %v124 = vld [vmem:[%s1 + $0x1dc] sm:$0xf]
    %v125 = vld [vmem:[%s1 + $0x1e0] sm:$0xff]
    %v126 = vld [vmem:[%s1 + $0x1e8] sm:$0xf]
    %v127 = vld [vmem:[%s1 + $0x1ec] sm:$0xff]
    %v128 = vld [vmem:[%s1 + $0x1f4] sm:$0xf]
    %v129 = vld [vmem:[%s1 + $0x1f8] sm:$0xff]
    %v130 = vld [vmem:[%s1 + $0x200] sm:$0xf]
    %v131 = vld [vmem:[%s1 + $0x204] sm:$0xff]
    %v132 = vld [vmem:[%s1 + $0x20c] sm:$0xf]
    %v133 = vld [vmem:[%s1 + $0x210] sm:$0xff]
    %v134 = vld [vmem:[%s1 + $0x218] sm:$0xf]
    %v135 = vld [vmem:[%s1 + $0x21c] sm:$0xff]
    %v136 = vld [vmem:[%s1 + $0x224] sm:$0xf]
    %v137 = vld [vmem:[%s1 + $0x228] sm:$0xff]
    %v138 = vld [vmem:[%s1 + $0x230] sm:$0xf]
    %v139 = vld [vmem:[%s1 + $0x234] sm:$0xff]
    %v140 = vld [vmem:[%s1 + $0x23c] sm:$0xf]
    %v141 = vld [vmem:[%s1 + $0x240] sm:$0xff]
    %v142 = vld [vmem:[%s1 + $0x248] sm:$0xf]
    %v143 = vld [vmem:[%s1 + $0x24c] sm:$0xff]
    %v144 = vld [vmem:[%s1 + $0x254] sm:$0xf]
    %v145 = vld [vmem:[%s1 + $0x258] sm:$0xff]
    %v146 = vld [vmem:[%s1 + $0x260] sm:$0xf]
    %v147 = vld [vmem:[%s1 + $0x264] sm:$0xff]
    %v148 = vld [vmem:[%s1 + $0x26c] sm:$0xf]
    %v149 = vld [vmem:[%s1 + $0x270] sm:$0xff]
    %v150 = vld [vmem:[%s1 + $0x278] sm:$0xf]
    %v151 = vld [vmem:[%s1 + $0x27c] sm:$0xff]
    %v152 = vld [vmem:[%s1 + $0x284] sm:$0xf]
    %v153 = vld [vmem:[%s1 + $0x288] sm:$0xff]
    %v154 = vld [vmem:[%s1 + $0x290] sm:$0xf]
    %v155 = vld [vmem:[%s1 + $0x294] sm:$0xff]
    %v156 = vld [vmem:[%s1 + $0x29c] sm:$0xf]
    %v157 = vld [vmem:[%s1 + $0x2a0] sm:$0xff]
    %v158 = vld [vmem:[%s1 + $0x2a8] sm:$0xf]
    %v159 = vld [vmem:[%s1 + $0x2ac] sm:$0xff]
    %v160 = vld [vmem:[%s1 + $0x2b4] sm:$0xf]
    %v161 = vld [vmem:[%s1 + $0x2b8] sm:$0xff]
    %v162 = vld [vmem:[%s1 + $0x2c0] sm:$0xf]
    %v163 = vld [vmem:[%s1 + $0x2c4] sm:$0xff]
    %v164 = vld [vmem:[%s1 + $0x2cc] sm:$0xf]
    %v165 = vld [vmem:[%s1 + $0x2d0] sm:$0xff]
    %v166 = vld [vmem:[%s1 + $0x2d8] sm:$0xf]
    %v167 = vld [vmem:[%s1 + $0x2dc] sm:$0xff]
    %v168 = vld [vmem:[%s1 + $0x2e4] sm:$0xf]
    %v169 = vld [vmem:[%s1 + $0x2e8] sm:$0xff]
    %v170 = vld [vmem:[%s1 + $0x2f0] sm:$0xf]
    %v171 = vld [vmem:[%s1 + $0x2f4] sm:$0xff]
    %v172 = vld [vmem:[%s1 + $0x2fc] sm:$0xf]
    %v173 = vld [vmem:[%s1 + $0x300] sm:$0xff]
    %v174 = vld [vmem:[%s1 + $0x308] sm:$0xf]
    %v175 = vld [vmem:[%s1 + $0x30c] sm:$0xff]
    %v176 = vld [vmem:[%s1 + $0x314] sm:$0xf]
    %v177 = vld [vmem:[%s1 + $0x318] sm:$0xff]
    %v178 = vld [vmem:[%s1 + $0x320] sm:$0xf]
    %v179 = vld [vmem:[%s1 + $0x324] sm:$0xff]
    %v180 = vld [vmem:[%s1 + $0x32c] sm:$0xf]
    %v181 = vld [vmem:[%s1 + $0x330] sm:$0xff]
    %v182 = vld [vmem:[%s1 + $0x338] sm:$0xf]
    %v183 = vld [vmem:[%s1 + $0x33c] sm:$0xff]
    %v184 = vld [vmem:[%s1 + $0x344] sm:$0xf]
    %v185 = vld [vmem:[%s1 + $0x348] sm:$0xff]
    %v186 = vld [vmem:[%s1 + $0x350] sm:$0xf]
    %v187 = vld [vmem:[%s1 + $0x354] sm:$0xff]
    %v188 = vld [vmem:[%s1 + $0x35c] sm:$0xf]
    %v189 = vld [vmem:[%s1 + $0x360] sm:$0xff]
    %v190 = vld [vmem:[%s1 + $0x368] sm:$0xf]
    %v191 = vld [vmem:[%s1 + $0x36c] sm:$0xff]
    %v192 = vld [vmem:[%s1 + $0x374] sm:$0xf]
    %v193 = vld [vmem:[%s1 + $0x378] sm:$0xff]
    %v194 = vld [vmem:[%s1 + $0x380] sm:$0xf]
    %v195 = vld [vmem:[%s1 + $0x384] sm:$0xff]
    %v196 = vld [vmem:[%s1 + $0x38c] sm:$0xf]
    %v197 = vld [vmem:[%s1 + $0x390] sm:$0xff]
    %v198 = vld [vmem:[%s1 + $0x398] sm:$0xf]
    %v199 = vld [vmem:[%s1 + $0x39c] sm:$0xff]
    %v200 = vld [vmem:[%s1 + $0x3a4] sm:$0xf]
    %v201 = vld [vmem:[%s1 + $0x3a8] sm:$0xff]
    %v202 = vld [vmem:[%s1 + $0x3b0] sm:$0xf]
    %v203 = vld [vmem:[%s1 + $0x3b4] sm:$0xff]
    %v204 = vld [vmem:[%s1 + $0x3bc] sm:$0xf]
    %v205 = vld [vmem:[%s1 + $0x3c0] sm:$0xff]
    %v206 = vld [vmem:[%s1 + $0x3c8] sm:$0xf]
    %v207 = vld [vmem:[%s1 + $0x3cc] sm:$0xff]
    %v208 = vld [vmem:[%s1 + $0x3d4] sm:$0xf]
    %v209 = vld [vmem:[%s1 + $0x3d8] sm:$0xff]
    %v210 = vld [vmem:[%s1 + $0x3e0] sm:$0xf]
    %v211 = vld [vmem:[%s1 + $0x3e4] sm:$0xff]
    %v212 = vld [vmem:[%s1 + $0x3ec] sm:$0xf]
    %v213 = vld [vmem:[%s1 + $0x3f0] sm:$0xff]
    %v214 = vld [vmem:[%s1 + $0x3f8] sm:$0xf]
    %v215 = vld [vmem:[%s1 + $0x3fc] sm:$0xff]
    %v216 = vld [vmem:[%s1 + $0x404] sm:$0xf]
    %v217 = vld [vmem:[%s1 + $0x408] sm:$0xff]
    %v218 = vld [vmem:[%s1 + $0x410] sm:$0xf]
    %v219 = vld [vmem:[%s1 + $0x414] sm:$0xff]
    %v220 = vld [vmem:[%s1 + $0x41c] sm:$0xf]
    %v221 = vld [vmem:[%s1 + $0x420] sm:$0xff]
    %v222 = vld [vmem:[%s1 + $0x428] sm:$0xf]
    %v223 = vld [vmem:[%s1 + $0x42c] sm:$0xff]
    %v224 = vld [vmem:[%s1 + $0x434] sm:$0xf]
    %v225 = vld [vmem:[%s1 + $0x438] sm:$0xff]
    %v226 = vld [vmem:[%s1 + $0x440] sm:$0xf]
    %v227 = vld [vmem:[%s1 + $0x444] sm:$0xff]
    %v228 = vld [vmem:[%s1 + $0x44c] sm:$0xf]
    %v229 = vld [vmem:[%s1 + $0x450] sm:$0xff]
    %v230 = vld [vmem:[%s1 + $0x458] sm:$0xf]
    %v231 = vld [vmem:[%s1 + $0x45c] sm:$0xff]
    %v232 = vld [vmem:[%s1 + $0x464] sm:$0xf]
    %v233 = vld [vmem:[%s1 + $0x468] sm:$0xff]
    %v234 = vld [vmem:[%s1 + $0x470] sm:$0xf]
    %v235 = vld [vmem:[%s1 + $0x474] sm:$0xff]
    %v236 = vld [vmem:[%s1 + $0x47c] sm:$0xf]
    %v237 = vld [vmem:[%s1 + $0x480] sm:$0xff]
    %v238 = vld [vmem:[%s1 + $0x488] sm:$0xf]
    %v239 = vld [vmem:[%s1 + $0x48c] sm:$0xff]
    %v240 = vld [vmem:[%s1 + $0x494] sm:$0xf]
    %v241 = vld [vmem:[%s2] sm:$0x7]
    %v243 = vlaneseq
    %v244 = vshrl.u32 %v243, 7
    %v245 = vsub.s32 0, %v244
    %v246 = vrot.slane %v241, %v245
    %v247 = vlaneseq
    %v248 = vshrl.u32 %v247, 7
    %v249 = vsub.s32 1, %v248
    %v250 = vrot.slane %v241, %v249
    %v251 = vlaneseq
    %v252 = vshrl.u32 %v251, 7
    %v253 = vsub.s32 2, %v252
    %v254 = vrot.slane %v241, %v253
    %v266 = vunpack.c.l.b16 %v37
    %v267 = vunpack.c.h.b16 %v37
    %v268 = vunpack.c.l.b16 %v38
    %v269 = vunpack.c.h.b16 %v38
    %v270 = vunpack.c.l.b16 %v39
    %v271 = vunpack.c.h.b16 %v39
    %v272 = vunpack.c.l.b16 %v40
    %v273 = vunpack.c.l.b16 %v41
    %v274 = vunpack.c.h.b16 %v41
    %v275 = vunpack.c.l.b16 %v42
    %v276 = vunpack.c.h.b16 %v42
    %v277 = vunpack.c.l.b16 %v43
    %v278 = vunpack.c.h.b16 %v43
    %v279 = vunpack.c.l.b16 %v44
    %v280 = vpack.c.b16 %v273, %v266
    %v281 = vpack.c.b16 %v274, %v267
    %v282 = vpack.c.b16 %v275, %v268
    %v283 = vpack.c.b16 %v276, %v269
    %v284 = vpack.c.b16 %v277, %v270
    %v285 = vpack.c.b16 %v278, %v271
    %v286 = vpack.c.b16 %v279, %v272
    %v489 = vunpack.c.l.b16 %v45
    %v490 = vunpack.c.h.b16 %v45
    %v491 = vunpack.c.l.b16 %v46
    %v492 = vunpack.c.l.b16 %v47
    %v493 = vunpack.c.h.b16 %v47
    %v494 = vunpack.c.l.b16 %v48
    %v495 = vunpack.c.l.b16 %v49
    %v496 = vunpack.c.h.b16 %v49
    %v497 = vunpack.c.l.b16 %v50
    %v498 = vunpack.c.l.b16 %v51
    %v499 = vunpack.c.h.b16 %v51
    %v500 = vunpack.c.l.b16 %v52
    %v501 = vunpack.c.l.b16 %v53
    %v502 = vunpack.c.h.b16 %v53
    %v503 = vunpack.c.l.b16 %v54
    %v504 = vunpack.c.l.b16 %v55
    %v505 = vunpack.c.h.b16 %v55
    %v506 = vunpack.c.l.b16 %v56
    %v507 = vunpack.c.l.b16 %v57
    %v508 = vunpack.c.h.b16 %v57
    %v509 = vunpack.c.l.b16 %v58
    %v510 = vunpack.c.l.b16 %v59
    %v511 = vunpack.c.h.b16 %v59
    %v512 = vunpack.c.l.b16 %v60
    %v513 = vunpack.c.l.b16 %v61
    %v514 = vunpack.c.h.b16 %v61
    %v515 = vunpack.c.l.b16 %v62
    %v516 = vunpack.c.l.b16 %v63
    %v517 = vunpack.c.h.b16 %v63
    %v518 = vunpack.c.l.b16 %v64
    %v519 = vunpack.c.l.b16 %v65
    %v520 = vunpack.c.h.b16 %v65
    %v521 = vunpack.c.l.b16 %v66
    %v522 = vunpack.c.l.b16 %v67
    %v523 = vunpack.c.h.b16 %v67
    %v524 = vunpack.c.l.b16 %v68
    %v525 = vunpack.c.l.b16 %v69
    %v526 = vunpack.c.h.b16 %v69
    %v527 = vunpack.c.l.b16 %v70
    %v528 = vunpack.c.l.b16 %v71
    %v529 = vunpack.c.h.b16 %v71
    %v530 = vunpack.c.l.b16 %v72
    %v531 = vunpack.c.l.b16 %v73
    %v532 = vunpack.c.h.b16 %v73
    %v533 = vunpack.c.l.b16 %v74
    %v534 = vunpack.c.l.b16 %v75
    %v535 = vunpack.c.h.b16 %v75
    %v536 = vunpack.c.l.b16 %v76
    %v537 = vunpack.c.l.b16 %v77
    %v538 = vunpack.c.h.b16 %v77
    %v539 = vunpack.c.l.b16 %v78
    %v540 = vunpack.c.l.b16 %v79
    %v541 = vunpack.c.h.b16 %v79
    %v542 = vunpack.c.l.b16 %v80
    %v543 = vunpack.c.l.b16 %v81
    %v544 = vunpack.c.h.b16 %v81
    %v545 = vunpack.c.l.b16 %v82
    %v546 = vunpack.c.l.b16 %v83
    %v547 = vunpack.c.h.b16 %v83
    %v548 = vunpack.c.l.b16 %v84
    %v549 = vunpack.c.l.b16 %v85
    %v550 = vunpack.c.h.b16 %v85
    %v551 = vunpack.c.l.b16 %v86
    %v552 = vunpack.c.l.b16 %v87
    %v553 = vunpack.c.h.b16 %v87
    %v554 = vunpack.c.l.b16 %v88
    %v555 = vunpack.c.l.b16 %v89
    %v556 = vunpack.c.h.b16 %v89
    %v557 = vunpack.c.l.b16 %v90
    %v558 = vunpack.c.l.b16 %v91
    %v559 = vunpack.c.h.b16 %v91
    %v560 = vunpack.c.l.b16 %v92
    %v561 = vunpack.c.l.b16 %v93
    %v562 = vunpack.c.h.b16 %v93
    %v563 = vunpack.c.l.b16 %v94
    %v564 = vunpack.c.l.b16 %v95
    %v565 = vunpack.c.h.b16 %v95
    %v566 = vunpack.c.l.b16 %v96
    %v567 = vunpack.c.l.b16 %v97
    %v568 = vunpack.c.h.b16 %v97
    %v569 = vunpack.c.l.b16 %v98
    %v570 = vunpack.c.l.b16 %v99
    %v571 = vunpack.c.h.b16 %v99
    %v572 = vunpack.c.l.b16 %v100
    %v573 = vunpack.c.l.b16 %v101
    %v574 = vunpack.c.h.b16 %v101
    %v575 = vunpack.c.l.b16 %v102
    %v576 = vunpack.c.l.b16 %v103
    %v577 = vunpack.c.h.b16 %v103
    %v578 = vunpack.c.l.b16 %v104
    %v579 = vunpack.c.l.b16 %v105
    %v580 = vunpack.c.h.b16 %v105
    %v581 = vunpack.c.l.b16 %v106
    %v582 = vunpack.c.l.b16 %v107
    %v583 = vunpack.c.h.b16 %v107
    %v584 = vunpack.c.l.b16 %v108
    %v585 = vunpack.c.l.b16 %v109
    %v586 = vunpack.c.h.b16 %v109
    %v587 = vunpack.c.l.b16 %v110
    %v588 = vunpack.c.l.b16 %v111
    %v589 = vunpack.c.h.b16 %v111
    %v590 = vunpack.c.l.b16 %v112
    %v591 = vunpack.c.l.b16 %v113
    %v592 = vunpack.c.h.b16 %v113
    %v593 = vunpack.c.l.b16 %v114
    %v594 = vunpack.c.l.b16 %v115
    %v595 = vunpack.c.h.b16 %v115
    %v596 = vunpack.c.l.b16 %v116
    %v597 = vunpack.c.l.b16 %v117
    %v598 = vunpack.c.h.b16 %v117
    %v599 = vunpack.c.l.b16 %v118
    %v600 = vunpack.c.l.b16 %v119
    %v601 = vunpack.c.h.b16 %v119
    %v602 = vunpack.c.l.b16 %v120
    %v603 = vunpack.c.l.b16 %v121
    %v604 = vunpack.c.h.b16 %v121
    %v605 = vunpack.c.l.b16 %v122
    %v606 = vunpack.c.l.b16 %v123
    %v607 = vunpack.c.h.b16 %v123
    %v608 = vunpack.c.l.b16 %v124
    %v609 = vunpack.c.l.b16 %v125
    %v610 = vunpack.c.h.b16 %v125
    %v611 = vunpack.c.l.b16 %v126
    %v612 = vunpack.c.l.b16 %v127
    %v613 = vunpack.c.h.b16 %v127
    %v614 = vunpack.c.l.b16 %v128
    %v615 = vunpack.c.l.b16 %v129
    %v616 = vunpack.c.h.b16 %v129
    %v617 = vunpack.c.l.b16 %v130
    %v618 = vunpack.c.l.b16 %v131
    %v619 = vunpack.c.h.b16 %v131
    %v620 = vunpack.c.l.b16 %v132
    %v621 = vunpack.c.l.b16 %v133
    %v622 = vunpack.c.h.b16 %v133
    %v623 = vunpack.c.l.b16 %v134
    %v624 = vunpack.c.l.b16 %v135
    %v625 = vunpack.c.h.b16 %v135
    %v626 = vunpack.c.l.b16 %v136
    %v627 = vunpack.c.l.b16 %v137
    %v628 = vunpack.c.h.b16 %v137
    %v629 = vunpack.c.l.b16 %v138
    %v630 = vunpack.c.l.b16 %v139
    %v631 = vunpack.c.h.b16 %v139
    %v632 = vunpack.c.l.b16 %v140
    %v633 = vunpack.c.l.b16 %v141
    %v634 = vunpack.c.h.b16 %v141
    %v635 = vunpack.c.l.b16 %v142
    %v636 = vunpack.c.l.b16 %v143
    %v637 = vunpack.c.h.b16 %v143
    %v638 = vunpack.c.l.b16 %v144
    %v639 = vunpack.c.l.b16 %v145
    %v640 = vunpack.c.h.b16 %v145
    %v641 = vunpack.c.l.b16 %v146
    %v642 = vunpack.c.l.b16 %v147
    %v643 = vunpack.c.h.b16 %v147
    %v644 = vunpack.c.l.b16 %v148
    %v645 = vunpack.c.l.b16 %v149
    %v646 = vunpack.c.h.b16 %v149
    %v647 = vunpack.c.l.b16 %v150
    %v648 = vunpack.c.l.b16 %v151
    %v649 = vunpack.c.h.b16 %v151
    %v650 = vunpack.c.l.b16 %v152
    %v651 = vunpack.c.l.b16 %v153
    %v652 = vunpack.c.h.b16 %v153
    %v653 = vunpack.c.l.b16 %v154
    %v654 = vunpack.c.l.b16 %v155
    %v655 = vunpack.c.h.b16 %v155
    %v656 = vunpack.c.l.b16 %v156
    %v657 = vunpack.c.l.b16 %v157
    %v658 = vunpack.c.h.b16 %v157
    %v659 = vunpack.c.l.b16 %v158
    %v660 = vunpack.c.l.b16 %v159
    %v661 = vunpack.c.h.b16 %v159
    %v662 = vunpack.c.l.b16 %v160
    %v663 = vunpack.c.l.b16 %v161
    %v664 = vunpack.c.h.b16 %v161
    %v665 = vunpack.c.l.b16 %v162
    %v666 = vunpack.c.l.b16 %v163
    %v667 = vunpack.c.h.b16 %v163
    %v668 = vunpack.c.l.b16 %v164
    %v669 = vunpack.c.l.b16 %v165
    %v670 = vunpack.c.h.b16 %v165
    %v671 = vunpack.c.l.b16 %v166
    %v672 = vunpack.c.l.b16 %v167
    %v673 = vunpack.c.h.b16 %v167
    %v674 = vunpack.c.l.b16 %v168
    %v675 = vunpack.c.l.b16 %v169
    %v676 = vunpack.c.h.b16 %v169
    %v677 = vunpack.c.l.b16 %v170
    %v678 = vunpack.c.l.b16 %v171
    %v679 = vunpack.c.h.b16 %v171
    %v680 = vunpack.c.l.b16 %v172
    %v681 = vunpack.c.l.b16 %v173
    %v682 = vunpack.c.h.b16 %v173
    %v683 = vunpack.c.l.b16 %v174
    %v684 = vunpack.c.l.b16 %v175
    %v685 = vunpack.c.h.b16 %v175
    %v686 = vunpack.c.l.b16 %v176
    %v687 = vunpack.c.l.b16 %v177
    %v688 = vunpack.c.h.b16 %v177
    %v689 = vunpack.c.l.b16 %v178
    %v690 = vunpack.c.l.b16 %v179
    %v691 = vunpack.c.h.b16 %v179
    %v692 = vunpack.c.l.b16 %v180
    %v693 = vunpack.c.l.b16 %v181
    %v694 = vunpack.c.h.b16 %v181
    %v695 = vunpack.c.l.b16 %v182
    %v696 = vunpack.c.l.b16 %v183
    %v697 = vunpack.c.h.b16 %v183
    %v698 = vunpack.c.l.b16 %v184
    %v699 = vunpack.c.l.b16 %v185
    %v700 = vunpack.c.h.b16 %v185
    %v701 = vunpack.c.l.b16 %v186
    %v702 = vunpack.c.l.b16 %v187
    %v703 = vunpack.c.h.b16 %v187
    %v704 = vunpack.c.l.b16 %v188
    %v705 = vunpack.c.l.b16 %v189
    %v706 = vunpack.c.h.b16 %v189
    %v707 = vunpack.c.l.b16 %v190
    %v708 = vunpack.c.l.b16 %v191
    %v709 = vunpack.c.h.b16 %v191
    %v710 = vunpack.c.l.b16 %v192
    %v711 = vunpack.c.l.b16 %v193
    %v712 = vunpack.c.h.b16 %v193
    %v713 = vunpack.c.l.b16 %v194
    %v714 = vunpack.c.l.b16 %v195
    %v715 = vunpack.c.h.b16 %v195
    %v716 = vunpack.c.l.b16 %v196
    %v717 = vunpack.c.l.b16 %v197
    %v718 = vunpack.c.h.b16 %v197
    %v719 = vunpack.c.l.b16 %v198
    %v720 = vunpack.c.l.b16 %v199
    %v721 = vunpack.c.h.b16 %v199
    %v722 = vunpack.c.l.b16 %v200
    %v723 = vunpack.c.l.b16 %v201
    %v724 = vunpack.c.h.b16 %v201
    %v725 = vunpack.c.l.b16 %v202
    %v726 = vunpack.c.l.b16 %v203
    %v727 = vunpack.c.h.b16 %v203
    %v728 = vunpack.c.l.b16 %v204
    %v729 = vunpack.c.l.b16 %v205
    %v730 = vunpack.c.h.b16 %v205
    %v731 = vunpack.c.l.b16 %v206
    %v732 = vunpack.c.l.b16 %v207
    %v733 = vunpack.c.h.b16 %v207
    %v734 = vunpack.c.l.b16 %v208
    %v735 = vunpack.c.l.b16 %v209
    %v736 = vunpack.c.h.b16 %v209
    %v737 = vunpack.c.l.b16 %v210
    %v738 = vunpack.c.l.b16 %v211
    %v739 = vunpack.c.h.b16 %v211
    %v740 = vunpack.c.l.b16 %v212
    %v741 = vunpack.c.l.b16 %v213
    %v742 = vunpack.c.h.b16 %v213
    %v743 = vunpack.c.l.b16 %v214
    %v744 = vunpack.c.l.b16 %v215
    %v745 = vunpack.c.h.b16 %v215
    %v746 = vunpack.c.l.b16 %v216
    %v747 = vunpack.c.l.b16 %v217
    %v748 = vunpack.c.h.b16 %v217
    %v749 = vunpack.c.l.b16 %v218
    %v750 = vunpack.c.l.b16 %v219
    %v751 = vunpack.c.h.b16 %v219
    %v752 = vunpack.c.l.b16 %v220
    %v753 = vunpack.c.l.b16 %v221
    %v754 = vunpack.c.h.b16 %v221
    %v755 = vunpack.c.l.b16 %v222
    %v756 = vunpack.c.l.b16 %v223
    %v757 = vunpack.c.h.b16 %v223
    %v758 = vunpack.c.l.b16 %v224
    %v759 = vunpack.c.l.b16 %v225
    %v760 = vunpack.c.h.b16 %v225
    %v761 = vunpack.c.l.b16 %v226
    %v762 = vunpack.c.l.b16 %v227
    %v763 = vunpack.c.h.b16 %v227
    %v764 = vunpack.c.l.b16 %v228
    %v765 = vunpack.c.l.b16 %v229
    %v766 = vunpack.c.h.b16 %v229
    %v767 = vunpack.c.l.b16 %v230
    %v768 = vunpack.c.l.b16 %v231
    %v769 = vunpack.c.h.b16 %v231
    %v770 = vunpack.c.l.b16 %v232
    %v771 = vunpack.c.l.b16 %v233
    %v772 = vunpack.c.h.b16 %v233
    %v773 = vunpack.c.l.b16 %v234
    %v774 = vunpack.c.l.b16 %v235
    %v775 = vunpack.c.h.b16 %v235
    %v776 = vunpack.c.l.b16 %v236
    %v777 = vunpack.c.l.b16 %v237
    %v778 = vunpack.c.h.b16 %v237
    %v779 = vunpack.c.l.b16 %v238
    %v780 = vunpack.c.l.b16 %v239
    %v781 = vunpack.c.h.b16 %v239
    %v782 = vunpack.c.l.b16 %v240
    %v783 = vpack.c.b16 %v492, %v489
    %v784 = vpack.c.b16 %v493, %v490
    %v785 = vpack.c.b16 %v494, %v491
    %v786 = vpack.c.b16 %v498, %v495
    %v787 = vpack.c.b16 %v499, %v496
    %v788 = vpack.c.b16 %v500, %v497
    %v789 = vpack.c.b16 %v504, %v501
    %v790 = vpack.c.b16 %v505, %v502
    %v791 = vpack.c.b16 %v506, %v503
    %v792 = vpack.c.b16 %v510, %v507
    %v793 = vpack.c.b16 %v511, %v508
    %v794 = vpack.c.b16 %v512, %v509
    %v795 = vpack.c.b16 %v516, %v513
    %v796 = vpack.c.b16 %v517, %v514
    %v797 = vpack.c.b16 %v518, %v515
    %v798 = vpack.c.b16 %v522, %v519
    %v799 = vpack.c.b16 %v523, %v520
    %v800 = vpack.c.b16 %v524, %v521
    %v801 = vpack.c.b16 %v528, %v525
    %v802 = vpack.c.b16 %v529, %v526
    %v803 = vpack.c.b16 %v530, %v527
    %v804 = vpack.c.b16 %v534, %v531
    %v805 = vpack.c.b16 %v535, %v532
    %v806 = vpack.c.b16 %v536, %v533
    %v807 = vpack.c.b16 %v540, %v537
    %v808 = vpack.c.b16 %v541, %v538
    %v809 = vpack.c.b16 %v542, %v539
    %v810 = vpack.c.b16 %v546, %v543
    %v811 = vpack.c.b16 %v547, %v544
    %v812 = vpack.c.b16 %v548, %v545
    %v813 = vpack.c.b16 %v552, %v549
    %v814 = vpack.c.b16 %v553, %v550
    %v815 = vpack.c.b16 %v554, %v551
    %v816 = vpack.c.b16 %v558, %v555
    %v817 = vpack.c.b16 %v559, %v556
    %v818 = vpack.c.b16 %v560, %v557
    %v819 = vpack.c.b16 %v564, %v561
    %v820 = vpack.c.b16 %v565, %v562
    %v821 = vpack.c.b16 %v566, %v563
    %v822 = vpack.c.b16 %v570, %v567
    %v823 = vpack.c.b16 %v571, %v568
    %v824 = vpack.c.b16 %v572, %v569
    %v825 = vpack.c.b16 %v576, %v573
    %v826 = vpack.c.b16 %v577, %v574
    %v827 = vpack.c.b16 %v578, %v575
    %v828 = vpack.c.b16 %v582, %v579
    %v829 = vpack.c.b16 %v583, %v580
    %v830 = vpack.c.b16 %v584, %v581
    %v831 = vpack.c.b16 %v588, %v585
    %v832 = vpack.c.b16 %v589, %v586
    %v833 = vpack.c.b16 %v590, %v587
    %v834 = vpack.c.b16 %v594, %v591
    %v835 = vpack.c.b16 %v595, %v592
    %v836 = vpack.c.b16 %v596, %v593
    %v837 = vpack.c.b16 %v600, %v597
    %v838 = vpack.c.b16 %v601, %v598
    %v839 = vpack.c.b16 %v602, %v599
    %v840 = vpack.c.b16 %v606, %v603
    %v841 = vpack.c.b16 %v607, %v604
    %v842 = vpack.c.b16 %v608, %v605
    %v843 = vpack.c.b16 %v612, %v609
    %v844 = vpack.c.b16 %v613, %v610
    %v845 = vpack.c.b16 %v614, %v611
    %v846 = vpack.c.b16 %v618, %v615
    %v847 = vpack.c.b16 %v619, %v616
    %v848 = vpack.c.b16 %v620, %v617
    %v849 = vpack.c.b16 %v624, %v621
    %v850 = vpack.c.b16 %v625, %v622
    %v851 = vpack.c.b16 %v626, %v623
    %v852 = vpack.c.b16 %v630, %v627
    %v853 = vpack.c.b16 %v631, %v628
    %v854 = vpack.c.b16 %v632, %v629
    %v855 = vpack.c.b16 %v636, %v633
    %v856 = vpack.c.b16 %v637, %v634
    %v857 = vpack.c.b16 %v638, %v635
    %v858 = vpack.c.b16 %v642, %v639
    %v859 = vpack.c.b16 %v643, %v640
    %v860 = vpack.c.b16 %v644, %v641
    %v861 = vpack.c.b16 %v648, %v645
    %v862 = vpack.c.b16 %v649, %v646
    %v863 = vpack.c.b16 %v650, %v647
    %v864 = vpack.c.b16 %v654, %v651
    %v865 = vpack.c.b16 %v655, %v652
    %v866 = vpack.c.b16 %v656, %v653
    %v867 = vpack.c.b16 %v660, %v657
    %v868 = vpack.c.b16 %v661, %v658
    %v869 = vpack.c.b16 %v662, %v659
    %v870 = vpack.c.b16 %v666, %v663
    %v871 = vpack.c.b16 %v667, %v664
    %v872 = vpack.c.b16 %v668, %v665
    %v873 = vpack.c.b16 %v672, %v669
    %v874 = vpack.c.b16 %v673, %v670
    %v875 = vpack.c.b16 %v674, %v671
    %v876 = vpack.c.b16 %v678, %v675
    %v877 = vpack.c.b16 %v679, %v676
    %v878 = vpack.c.b16 %v680, %v677
    %v879 = vpack.c.b16 %v684, %v681
    %v880 = vpack.c.b16 %v685, %v682
    %v881 = vpack.c.b16 %v686, %v683
    %v882 = vpack.c.b16 %v690, %v687
    %v883 = vpack.c.b16 %v691, %v688
    %v884 = vpack.c.b16 %v692, %v689
    %v885 = vpack.c.b16 %v696, %v693
    %v886 = vpack.c.b16 %v697, %v694
    %v887 = vpack.c.b16 %v698, %v695
    %v888 = vpack.c.b16 %v702, %v699
    %v889 = vpack.c.b16 %v703, %v700
    %v890 = vpack.c.b16 %v704, %v701
    %v891 = vpack.c.b16 %v708, %v705
    %v892 = vpack.c.b16 %v709, %v706
    %v893 = vpack.c.b16 %v710, %v707
    %v894 = vpack.c.b16 %v714, %v711
    %v895 = vpack.c.b16 %v715, %v712
    %v896 = vpack.c.b16 %v716, %v713
    %v897 = vpack.c.b16 %v720, %v717
    %v898 = vpack.c.b16 %v721, %v718
    %v899 = vpack.c.b16 %v722, %v719
    %v900 = vpack.c.b16 %v726, %v723
    %v901 = vpack.c.b16 %v727, %v724
    %v902 = vpack.c.b16 %v728, %v725
    %v903 = vpack.c.b16 %v732, %v729
    %v904 = vpack.c.b16 %v733, %v730
    %v905 = vpack.c.b16 %v734, %v731
    %v906 = vpack.c.b16 %v738, %v735
    %v907 = vpack.c.b16 %v739, %v736
    %v908 = vpack.c.b16 %v740, %v737
    %v909 = vpack.c.b16 %v744, %v741
    %v910 = vpack.c.b16 %v745, %v742
    %v911 = vpack.c.b16 %v746, %v743
    %v912 = vpack.c.b16 %v750, %v747
    %v913 = vpack.c.b16 %v751, %v748
    %v914 = vpack.c.b16 %v752, %v749
    %v915 = vpack.c.b16 %v756, %v753
    %v916 = vpack.c.b16 %v757, %v754
    %v917 = vpack.c.b16 %v758, %v755
    %v918 = vpack.c.b16 %v762, %v759
    %v919 = vpack.c.b16 %v763, %v760
    %v920 = vpack.c.b16 %v764, %v761
    %v921 = vpack.c.b16 %v768, %v765
    %v922 = vpack.c.b16 %v769, %v766
    %v923 = vpack.c.b16 %v770, %v767
    %v924 = vpack.c.b16 %v774, %v771
    %v925 = vpack.c.b16 %v775, %v772
    %v926 = vpack.c.b16 %v776, %v773
    %v927 = vpack.c.b16 %v780, %v777
    %v928 = vpack.c.b16 %v781, %v778
    %v929 = vpack.c.b16 %v782, %v779
    %vm1077 = vcmask 130048
    %v1079 = vsel %vm1077, %v286, 0
    %1081 = vmatprep.subr.bf16.mxu0 %v784
    %1082 = vmatpush1.bf16.msra.mxu0 %v783
    %1083 = vmatprep.subr.bf16.mxu0 %v787
    %1084 = vmatpush1.bf16.msra.mxu0 %v786
    %1085 = vmatprep.subr.bf16.mxu0 %v790
    %1086 = vmatpush1.bf16.msra.mxu0 %v789
    %1087 = vmatprep.subr.bf16.mxu0 %v793
    %1088 = vmatpush1.bf16.msra.mxu0 %v792
    %1089 = vmatprep.subr.bf16.mxu0 %v796
    %1090 = vmatpush1.bf16.msra.mxu0 %v795
    %1091 = vmatprep.subr.bf16.mxu0 %v799
    %1092 = vmatpush1.bf16.msra.mxu0 %v798
    %1093 = vmatprep.subr.bf16.mxu0 %v802
    %1094 = vmatpush1.bf16.msra.mxu0 %v801
    %1095 = vmatprep.subr.bf16.mxu0 %v805
    %1096 = vmatpush1.bf16.msra.mxu0 %v804
    %1097 = vmatprep.subr.bf16.mxu0 %v808
    %1098 = vmatpush1.bf16.msra.mxu0 %v807
    %1099 = vmatprep.subr.bf16.mxu0 %v811
    %1100 = vmatpush1.bf16.msra.mxu0 %v810
    %1101 = vmatprep.subr.bf16.mxu0 %v814
    %1102 = vmatpush1.bf16.msra.mxu0 %v813
    %1103 = vmatprep.subr.bf16.mxu0 %v817
    %1104 = vmatpush1.bf16.msra.mxu0 %v816
    %1105 = vmatprep.subr.bf16.mxu0 %v820
    %1106 = vmatpush1.bf16.msra.mxu0 %v819
    %1107 = vmatprep.subr.bf16.mxu0 %v823
    %1108 = vmatpush1.bf16.msra.mxu0 %v822
    %1109 = vmatprep.subr.bf16.mxu0 %v826
    %1110 = vmatpush1.bf16.msra.mxu0 %v825
    %1111 = vmatprep.subr.bf16.mxu0 %v829
    %1112 = vmatpush1.bf16.msra.mxu0 %v828
    %1113 = vmatprep.mubr.bf16.mxu0 %v281
    %1114 = vmatmul.mubr.bf16.gmra.mrb[0].mxu0 %v280
    %v1115 = vpop.f32.mrb[0].mxu0
    %v1116 = vadd.f32 %v246, %v1115
    %v1117 = vpop.f32.mrb[0].mxu0
    %v1118 = vadd.f32 %v250, %v1117
    %v1119 = vpop.f32.mrb[0].mxu0
    %v1120 = vadd.f32 %v246, %v1119
    %v1121 = vpop.f32.mrb[0].mxu0
    %v1122 = vadd.f32 %v250, %v1121
    %1123 = vdwg.mxu0
    %1124 = vmatprep.subr.bf16.mxu0 %v832
    %1125 = vmatpush1.bf16.msra.mxu0 %v831
    %1126 = vmatprep.subr.bf16.mxu0 %v835
    %1127 = vmatpush1.bf16.msra.mxu0 %v834
    %1128 = vmatprep.subr.bf16.mxu0 %v838
    %1129 = vmatpush1.bf16.msra.mxu0 %v837
    %1130 = vmatprep.subr.bf16.mxu0 %v841
    %1131 = vmatpush1.bf16.msra.mxu0 %v840
    %1132 = vmatprep.subr.bf16.mxu0 %v844
    %1133 = vmatpush1.bf16.msra.mxu0 %v843
    %1134 = vmatprep.subr.bf16.mxu0 %v847
    %1135 = vmatpush1.bf16.msra.mxu0 %v846
    %1136 = vmatprep.subr.bf16.mxu0 %v850
    %1137 = vmatpush1.bf16.msra.mxu0 %v849
    %1138 = vmatprep.subr.bf16.mxu0 %v853
    %1139 = vmatpush1.bf16.msra.mxu0 %v852
    %1140 = vmatprep.subr.bf16.mxu0 %v856
    %1141 = vmatpush1.bf16.msra.mxu0 %v855
    %1142 = vmatprep.subr.bf16.mxu0 %v859
    %1143 = vmatpush1.bf16.msra.mxu0 %v858
    %1144 = vmatprep.subr.bf16.mxu0 %v862
    %1145 = vmatpush1.bf16.msra.mxu0 %v861
    %1146 = vmatprep.subr.bf16.mxu0 %v865
    %1147 = vmatpush1.bf16.msra.mxu0 %v864
    %1148 = vmatprep.subr.bf16.mxu0 %v868
    %1149 = vmatpush1.bf16.msra.mxu0 %v867
    %1150 = vmatprep.subr.bf16.mxu0 %v871
    %1151 = vmatpush1.bf16.msra.mxu0 %v870
    %1152 = vmatprep.subr.bf16.mxu0 %v874
    %1153 = vmatpush1.bf16.msra.mxu0 %v873
    %1154 = vmatprep.subr.bf16.mxu0 %v877
    %1155 = vmatpush1.bf16.msra.mxu0 %v876
    %1156 = vmatprep.mubr.bf16.mxu0 %v283
    %1157 = vmatmul.mubr.bf16.gmra.mrb[0].mxu0 %v282
    %v1158 = vpop.f32.mrb[0].mxu0
    %v1159 = vadd.f32 %v1116, %v1158
    %v1160 = vpop.f32.mrb[0].mxu0
    %v1161 = vadd.f32 %v1118, %v1160
    %v1162 = vpop.f32.mrb[0].mxu0
    %v1163 = vadd.f32 %v1120, %v1162
    %v1164 = vpop.f32.mrb[0].mxu0
    %v1165 = vadd.f32 %v1122, %v1164
    %1166 = vdwg.mxu0
    %1167 = vmatprep.subr.bf16.mxu0 %v880
    %1168 = vmatpush1.bf16.msra.mxu0 %v879
    %1169 = vmatprep.subr.bf16.mxu0 %v883
    %1170 = vmatpush1.bf16.msra.mxu0 %v882
    %1171 = vmatprep.subr.bf16.mxu0 %v886
    %1172 = vmatpush1.bf16.msra.mxu0 %v885
    %1173 = vmatprep.subr.bf16.mxu0 %v889
    %1174 = vmatpush1.bf16.msra.mxu0 %v888
    %1175 = vmatprep.subr.bf16.mxu0 %v892
    %1176 = vmatpush1.bf16.msra.mxu0 %v891
    %1177 = vmatprep.subr.bf16.mxu0 %v895
    %1178 = vmatpush1.bf16.msra.mxu0 %v894
    %1179 = vmatprep.subr.bf16.mxu0 %v898
    %1180 = vmatpush1.bf16.msra.mxu0 %v897
    %1181 = vmatprep.subr.bf16.mxu0 %v901
    %1182 = vmatpush1.bf16.msra.mxu0 %v900
    %1183 = vmatprep.subr.bf16.mxu0 %v904
    %1184 = vmatpush1.bf16.msra.mxu0 %v903
    %1185 = vmatprep.subr.bf16.mxu0 %v907
    %1186 = vmatpush1.bf16.msra.mxu0 %v906
    %1187 = vmatprep.subr.bf16.mxu0 %v910
    %1188 = vmatpush1.bf16.msra.mxu0 %v909
    %1189 = vmatprep.subr.bf16.mxu0 %v913
    %1190 = vmatpush1.bf16.msra.mxu0 %v912
    %1191 = vmatprep.subr.bf16.mxu0 %v916
    %1192 = vmatpush1.bf16.msra.mxu0 %v915
    %1193 = vmatprep.subr.bf16.mxu0 %v919
    %1194 = vmatpush1.bf16.msra.mxu0 %v918
    %1195 = vmatprep.subr.bf16.mxu0 %v922
    %1196 = vmatpush1.bf16.msra.mxu0 %v921
    %1197 = vmatprep.subr.bf16.mxu0 %v925
    %1198 = vmatpush1.bf16.msra.mxu0 %v924
    %1199 = vmatprep.mubr.bf16.mxu0 %v285
    %1200 = vmatmul.mubr.bf16.gmra.mrb[0].mxu0 %v284
    %v1201 = vpop.f32.mrb[0].mxu0
    %v1202 = vadd.f32 %v1159, %v1201
    %v1203 = vpop.f32.mrb[0].mxu0
    %v1204 = vadd.f32 %v1161, %v1203
    %v1205 = vpop.f32.mrb[0].mxu0
    %v1206 = vadd.f32 %v1163, %v1205
    %v1207 = vpop.f32.mrb[0].mxu0
    %v1208 = vadd.f32 %v1165, %v1207
    %1209 = vdwg.mxu0
    %1210 = vmatprep.subr.bf16.mxu0 %v928
    %1211 = vmatpush1.bf16.msra.mxu0 %v927
    %1212 = vmatprep.subr.bf16.mxu0 0
    %1213 = vmatpush1.bf16.msra.mxu0 0
    %1214 = vmatprep.subr.bf16.mxu0 0
    %1215 = vmatpush1.bf16.msra.mxu0 0
    %1216 = vmatprep.subr.bf16.mxu0 0
    %1217 = vmatpush1.bf16.msra.mxu0 0
    %1218 = vmatprep.subr.bf16.mxu0 0
    %1219 = vmatpush1.bf16.msra.mxu0 0
    %1220 = vmatprep.subr.bf16.mxu0 0
    %1221 = vmatpush1.bf16.msra.mxu0 0
    %1222 = vmatprep.subr.bf16.mxu0 0
    %1223 = vmatpush1.bf16.msra.mxu0 0
    %1224 = vmatprep.subr.bf16.mxu0 0
    %1225 = vmatpush1.bf16.msra.mxu0 0
    %1226 = vmatprep.subr.bf16.mxu0 0
    %1227 = vmatpush1.bf16.msra.mxu0 0
    %1228 = vmatprep.subr.bf16.mxu0 0
    %1229 = vmatpush1.bf16.msra.mxu0 0
    %1230 = vmatprep.subr.bf16.mxu0 0
    %1231 = vmatpush1.bf16.msra.mxu0 0
    %1232 = vmatprep.subr.bf16.mxu0 0
    %1233 = vmatpush1.bf16.msra.mxu0 0
    %1234 = vmatprep.subr.bf16.mxu0 0
    %1235 = vmatpush1.bf16.msra.mxu0 0
    %1236 = vmatprep.subr.bf16.mxu0 0
    %1237 = vmatpush1.bf16.msra.mxu0 0
    %1238 = vmatprep.subr.bf16.mxu0 0
    %1239 = vmatpush1.bf16.msra.mxu0 0
    %1240 = vmatprep.subr.bf16.mxu0 0
    %1241 = vmatpush1.bf16.msra.mxu0 0
    %1242 = vmatprep.mubr.bf16.mxu0 0
    %1243 = vmatmul.mubr.bf16.gmra.mrb[0].mxu0 %v1079
    %v1244 = vpop.f32.mrb[0].mxu0
    %v1245 = vadd.f32 %v1202, %v1244
    %v1246 = vpop.f32.mrb[0].mxu0
    %v1247 = vadd.f32 %v1204, %v1246
    %v1248 = vpop.f32.mrb[0].mxu0
    %v1249 = vadd.f32 %v1206, %v1248
    %v1250 = vpop.f32.mrb[0].mxu0
    %v1251 = vadd.f32 %v1208, %v1250
    %1252 = vdwg.mxu0
    %1253 = vmatprep.subr.bf16.mxu0 0
    %1254 = vmatpush1.bf16.msra.mxu0 %v785
    %1255 = vmatprep.subr.bf16.mxu0 0
    %1256 = vmatpush1.bf16.msra.mxu0 %v788
    %1257 = vmatprep.subr.bf16.mxu0 0
    %1258 = vmatpush1.bf16.msra.mxu0 %v791
    %1259 = vmatprep.subr.bf16.mxu0 0
    %1260 = vmatpush1.bf16.msra.mxu0 %v794
    %1261 = vmatprep.subr.bf16.mxu0 0
    %1262 = vmatpush1.bf16.msra.mxu0 %v797
    %1263 = vmatprep.subr.bf16.mxu0 0
    %1264 = vmatpush1.bf16.msra.mxu0 %v800
    %1265 = vmatprep.subr.bf16.mxu0 0
    %1266 = vmatpush1.bf16.msra.mxu0 %v803
    %1267 = vmatprep.subr.bf16.mxu0 0
    %1268 = vmatpush1.bf16.msra.mxu0 %v806
    %1269 = vmatprep.subr.bf16.mxu0 0
    %1270 = vmatpush1.bf16.msra.mxu0 %v809
    %1271 = vmatprep.subr.bf16.mxu0 0
    %1272 = vmatpush1.bf16.msra.mxu0 %v812
    %1273 = vmatprep.subr.bf16.mxu0 0
    %1274 = vmatpush1.bf16.msra.mxu0 %v815
    %1275 = vmatprep.subr.bf16.mxu0 0
    %1276 = vmatpush1.bf16.msra.mxu0 %v818
    %1277 = vmatprep.subr.bf16.mxu0 0
    %1278 = vmatpush1.bf16.msra.mxu0 %v821
    %1279 = vmatprep.subr.bf16.mxu0 0
    %1280 = vmatpush1.bf16.msra.mxu0 %v824
    %1281 = vmatprep.subr.bf16.mxu0 0
    %1282 = vmatpush1.bf16.msra.mxu0 %v827
    %1283 = vmatprep.subr.bf16.mxu0 0
    %1284 = vmatpush1.bf16.msra.mxu0 %v830
    %1285 = vmatprep.mubr.bf16.mxu0 %v281
    %1286 = vmatmul.mubr.bf16.gmra.mrb[0].mxu0 %v280
    %v1287 = vpop.f32.mrb[0].mxu0
    %v1288 = vadd.f32 %v254, %v1287
    %v1289 = vpop.f32.mrb[0].mxu0
    %v1290 = vpop.f32.mrb[0].mxu0
    %v1291 = vadd.f32 %v254, %v1290
    %v1292 = vpop.f32.mrb[0].mxu0
    %1293 = vdwg.mxu0
    %1294 = vmatprep.subr.bf16.mxu0 0
    %1295 = vmatpush1.bf16.msra.mxu0 %v833
    %1296 = vmatprep.subr.bf16.mxu0 0
    %1297 = vmatpush1.bf16.msra.mxu0 %v836
    %1298 = vmatprep.subr.bf16.mxu0 0
    %1299 = vmatpush1.bf16.msra.mxu0 %v839
    %1300 = vmatprep.subr.bf16.mxu0 0
    %1301 = vmatpush1.bf16.msra.mxu0 %v842
    %1302 = vmatprep.subr.bf16.mxu0 0
    %1303 = vmatpush1.bf16.msra.mxu0 %v845
    %1304 = vmatprep.subr.bf16.mxu0 0
    %1305 = vmatpush1.bf16.msra.mxu0 %v848
    %1306 = vmatprep.subr.bf16.mxu0 0
    %1307 = vmatpush1.bf16.msra.mxu0 %v851
    %1308 = vmatprep.subr.bf16.mxu0 0
    %1309 = vmatpush1.bf16.msra.mxu0 %v854
    %1310 = vmatprep.subr.bf16.mxu0 0
    %1311 = vmatpush1.bf16.msra.mxu0 %v857
    %1312 = vmatprep.subr.bf16.mxu0 0
    %1313 = vmatpush1.bf16.msra.mxu0 %v860
    %1314 = vmatprep.subr.bf16.mxu0 0
    %1315 = vmatpush1.bf16.msra.mxu0 %v863
    %1316 = vmatprep.subr.bf16.mxu0 0
    %1317 = vmatpush1.bf16.msra.mxu0 %v866
    %1318 = vmatprep.subr.bf16.mxu0 0
    %1319 = vmatpush1.bf16.msra.mxu0 %v869
    %1320 = vmatprep.subr.bf16.mxu0 0
    %1321 = vmatpush1.bf16.msra.mxu0 %v872
    %1322 = vmatprep.subr.bf16.mxu0 0
    %1323 = vmatpush1.bf16.msra.mxu0 %v875
    %1324 = vmatprep.subr.bf16.mxu0 0
    %1325 = vmatpush1.bf16.msra.mxu0 %v878
    %1326 = vmatprep.mubr.bf16.mxu0 %v283
    %1327 = vmatmul.mubr.bf16.gmra.mrb[0].mxu0 %v282
    %v1328 = vpop.f32.mrb[0].mxu0
    %v1329 = vadd.f32 %v1288, %v1328
    %v1330 = vpop.f32.mrb[0].mxu0
    %v1331 = vpop.f32.mrb[0].mxu0
    %v1332 = vadd.f32 %v1291, %v1331
    %v1333 = vpop.f32.mrb[0].mxu0
    %1334 = vdwg.mxu0
    %1335 = vmatprep.subr.bf16.mxu0 0
    %1336 = vmatpush1.bf16.msra.mxu0 %v881
    %1337 = vmatprep.subr.bf16.mxu0 0
    %1338 = vmatpush1.bf16.msra.mxu0 %v884
    %1339 = vmatprep.subr.bf16.mxu0 0
    %1340 = vmatpush1.bf16.msra.mxu0 %v887
    %1341 = vmatprep.subr.bf16.mxu0 0
    %1342 = vmatpush1.bf16.msra.mxu0 %v890
    %1343 = vmatprep.subr.bf16.mxu0 0
    %1344 = vmatpush1.bf16.msra.mxu0 %v893
    %1345 = vmatprep.subr.bf16.mxu0 0
    %1346 = vmatpush1.bf16.msra.mxu0 %v896
    %1347 = vmatprep.subr.bf16.mxu0 0
    %1348 = vmatpush1.bf16.msra.mxu0 %v899
    %1349 = vmatprep.subr.bf16.mxu0 0
    %1350 = vmatpush1.bf16.msra.mxu0 %v902
    %1351 = vmatprep.subr.bf16.mxu0 0
    %1352 = vmatpush1.bf16.msra.mxu0 %v905
    %1353 = vmatprep.subr.bf16.mxu0 0
    %1354 = vmatpush1.bf16.msra.mxu0 %v908
    %1355 = vmatprep.subr.bf16.mxu0 0
    %1356 = vmatpush1.bf16.msra.mxu0 %v911
    %1357 = vmatprep.subr.bf16.mxu0 0
    %1358 = vmatpush1.bf16.msra.mxu0 %v914
    %1359 = vmatprep.subr.bf16.mxu0 0
    %1360 = vmatpush1.bf16.msra.mxu0 %v917
    %1361 = vmatprep.subr.bf16.mxu0 0
    %1362 = vmatpush1.bf16.msra.mxu0 %v920
    %1363 = vmatprep.subr.bf16.mxu0 0
    %1364 = vmatpush1.bf16.msra.mxu0 %v923
    %1365 = vmatprep.subr.bf16.mxu0 0
    %1366 = vmatpush1.bf16.msra.mxu0 %v926
    %1367 = vmatprep.mubr.bf16.mxu0 %v285
    %1368 = vmatmul.mubr.bf16.gmra.mrb[0].mxu0 %v284
    %v1369 = vpop.f32.mrb[0].mxu0
    %v1370 = vadd.f32 %v1329, %v1369
    %v1371 = vpop.f32.mrb[0].mxu0
    %v1372 = vpop.f32.mrb[0].mxu0
    %v1373 = vadd.f32 %v1332, %v1372
    %v1374 = vpop.f32.mrb[0].mxu0
    %1375 = vdwg.mxu0
    %1376 = vmatprep.subr.bf16.mxu0 0
    %1377 = vmatpush1.bf16.msra.mxu0 %v929
    %1378 = vmatprep.subr.bf16.mxu0 0
    %1379 = vmatpush1.bf16.msra.mxu0 0
    %1380 = vmatprep.subr.bf16.mxu0 0
    %1381 = vmatpush1.bf16.msra.mxu0 0
    %1382 = vmatprep.subr.bf16.mxu0 0
    %1383 = vmatpush1.bf16.msra.mxu0 0
    %1384 = vmatprep.subr.bf16.mxu0 0
    %1385 = vmatpush1.bf16.msra.mxu0 0
    %1386 = vmatprep.subr.bf16.mxu0 0
    %1387 = vmatpush1.bf16.msra.mxu0 0
    %1388 = vmatprep.subr.bf16.mxu0 0
    %1389 = vmatpush1.bf16.msra.mxu0 0
    %1390 = vmatprep.subr.bf16.mxu0 0
    %1391 = vmatpush1.bf16.msra.mxu0 0
    %1392 = vmatprep.subr.bf16.mxu0 0
    %1393 = vmatpush1.bf16.msra.mxu0 0
    %1394 = vmatprep.subr.bf16.mxu0 0
    %1395 = vmatpush1.bf16.msra.mxu0 0
    %1396 = vmatprep.subr.bf16.mxu0 0
    %1397 = vmatpush1.bf16.msra.mxu0 0
    %1398 = vmatprep.subr.bf16.mxu0 0
    %1399 = vmatpush1.bf16.msra.mxu0 0
    %1400 = vmatprep.subr.bf16.mxu0 0
    %1401 = vmatpush1.bf16.msra.mxu0 0
    %1402 = vmatprep.subr.bf16.mxu0 0
    %1403 = vmatpush1.bf16.msra.mxu0 0
    %1404 = vmatprep.subr.bf16.mxu0 0
    %1405 = vmatpush1.bf16.msra.mxu0 0
    %1406 = vmatprep.subr.bf16.mxu0 0
    %1407 = vmatpush1.bf16.msra.mxu0 0
    %1408 = vmatprep.mubr.bf16.mxu0 0
    %1409 = vmatmul.mubr.bf16.gmra.mrb[0].mxu0 %v1079
    %v1410 = vpop.f32.mrb[0].mxu0
    %v1411 = vadd.f32 %v1370, %v1410
    %v1412 = vpop.f32.mrb[0].mxu0
    %v1413 = vpop.f32.mrb[0].mxu0
    %v1414 = vadd.f32 %v1373, %v1413
    %v1415 = vpop.f32.mrb[0].mxu0
    %1416 = vdwg.mxu0
    %v1417 = vmax.f32 %v1245, 0.0
    %v1418 = vmax.f32 %v1247, 0.0
    %v1419 = vmax.f32 %v1411, 0.0
    %v1420 = vmax.f32 %v1249, 0.0
    %v1421 = vmax.f32 %v1251, 0.0
    %v1422 = vmax.f32 %v1414, 0.0
    %v1423 = vpack.c.bf16 %v1420, %v1417
    %v1424 = vpack.c.bf16 %v1421, %v1418
    %v1425 = vpack.c.bf16 %v1422, %v1419
    %v1426 = vld [vmem:[%s3] sm:$0xf]
    %v1427 = vld [vmem:[%s3 + $0x4] sm:$0xf]
    %v1428 = vld [vmem:[%s3 + $0x8] sm:$0xf]
    %v1429 = vld [vmem:[%s3 + $0xc] sm:$0xf]
    %v1430 = vld [vmem:[%s3 + $0x10] sm:$0xf]
    %v1431 = vld [vmem:[%s3 + $0x14] sm:$0xf]
    %v1432 = vld [vmem:[%s3 + $0x18] sm:$0xf]
    %v1433 = vld [vmem:[%s3 + $0x1c] sm:$0xf]
    %v1434 = vld [vmem:[%s3 + $0x20] sm:$0xf]
    %v1435 = vld [vmem:[%s3 + $0x24] sm:$0xf]
    %v1436 = vld [vmem:[%s3 + $0x28] sm:$0xf]
    %v1437 = vld [vmem:[%s3 + $0x2c] sm:$0xf]
    %v1438 = vld [vmem:[%s3 + $0x30] sm:$0xf]
    %v1439 = vld [vmem:[%s3 + $0x34] sm:$0xf]
    %v1440 = vld [vmem:[%s3 + $0x38] sm:$0xf]
    %v1441 = vld [vmem:[%s3 + $0x3c] sm:$0xf]
    %v1442 = vld [vmem:[%s3 + $0x40] sm:$0xf]
    %v1443 = vld [vmem:[%s3 + $0x44] sm:$0xf]
    %v1444 = vld [vmem:[%s3 + $0x48] sm:$0xf]
    %v1445 = vld [vmem:[%s3 + $0x4c] sm:$0xf]
    %v1446 = vld [vmem:[%s3 + $0x50] sm:$0xf]
    %v1447 = vld [vmem:[%s3 + $0x54] sm:$0xf]
    %v1448 = vld [vmem:[%s3 + $0x58] sm:$0xf]
    %v1449 = vld [vmem:[%s3 + $0x5c] sm:$0xf]
    %v1450 = vld [vmem:[%s3 + $0x60] sm:$0xf]
    %v1451 = vld [vmem:[%s3 + $0x64] sm:$0xf]
    %v1452 = vld [vmem:[%s3 + $0x68] sm:$0xf]
    %v1453 = vld [vmem:[%s3 + $0x6c] sm:$0xf]
    %v1454 = vld [vmem:[%s3 + $0x70] sm:$0xf]
    %v1455 = vld [vmem:[%s3 + $0x74] sm:$0xf]
    %v1456 = vld [vmem:[%s3 + $0x78] sm:$0xf]
    %v1457 = vld [vmem:[%s3 + $0x7c] sm:$0xf]
    %v1458 = vld [vmem:[%s3 + $0x80] sm:$0xf]
    %v1459 = vld [vmem:[%s3 + $0x84] sm:$0xf]
    %v1460 = vld [vmem:[%s3 + $0x88] sm:$0xf]
    %v1461 = vld [vmem:[%s3 + $0x8c] sm:$0xf]
    %v1462 = vld [vmem:[%s3 + $0x90] sm:$0xf]
    %v1463 = vld [vmem:[%s3 + $0x94] sm:$0xf]
    %v1464 = vld [vmem:[%s3 + $0x98] sm:$0xf]
    %v1465 = vld [vmem:[%s3 + $0x9c] sm:$0xf]
    %v1466 = vld [vmem:[%s3 + $0xa0] sm:$0xf]
    %v1467 = vld [vmem:[%s3 + $0xa4] sm:$0xf]
    %v1468 = vld [vmem:[%s3 + $0xa8] sm:$0xf]
    %v1469 = vld [vmem:[%s3 + $0xac] sm:$0xf]
    %v1470 = vld [vmem:[%s3 + $0xb0] sm:$0xf]
    %v1471 = vld [vmem:[%s3 + $0xb4] sm:$0xf]
    %v1472 = vld [vmem:[%s3 + $0xb8] sm:$0xf]
    %v1473 = vld [vmem:[%s3 + $0xbc] sm:$0xf]
    %v1474 = vld [vmem:[%s4] sm:$0x1]
    %v1476 = vlaneseq
    %v1477 = vshrl.u32 %v1476, 7
    %v1478 = vsub.s32 0, %v1477
    %v1479 = vrot.slane %v1474, %v1478
    %v1529 = vunpack.c.l.b16 %v1426
    %v1530 = vunpack.c.l.b16 %v1427
    %v1531 = vunpack.c.l.b16 %v1428
    %v1532 = vunpack.c.l.b16 %v1429
    %v1533 = vunpack.c.l.b16 %v1430
    %v1534 = vunpack.c.l.b16 %v1431
    %v1535 = vunpack.c.l.b16 %v1432
    %v1536 = vunpack.c.l.b16 %v1433
    %v1537 = vunpack.c.l.b16 %v1434
    %v1538 = vunpack.c.l.b16 %v1435
    %v1539 = vunpack.c.l.b16 %v1436
    %v1540 = vunpack.c.l.b16 %v1437
    %v1541 = vunpack.c.l.b16 %v1438
    %v1542 = vunpack.c.l.b16 %v1439
    %v1543 = vunpack.c.l.b16 %v1440
    %v1544 = vunpack.c.l.b16 %v1441
    %v1545 = vunpack.c.l.b16 %v1442
    %v1546 = vunpack.c.l.b16 %v1443
    %v1547 = vunpack.c.l.b16 %v1444
    %v1548 = vunpack.c.l.b16 %v1445
    %v1549 = vunpack.c.l.b16 %v1446
    %v1550 = vunpack.c.l.b16 %v1447
    %v1551 = vunpack.c.l.b16 %v1448
    %v1552 = vunpack.c.l.b16 %v1449
    %v1553 = vunpack.c.l.b16 %v1450
    %v1554 = vunpack.c.l.b16 %v1451
    %v1555 = vunpack.c.l.b16 %v1452
    %v1556 = vunpack.c.l.b16 %v1453
    %v1557 = vunpack.c.l.b16 %v1454
    %v1558 = vunpack.c.l.b16 %v1455
    %v1559 = vunpack.c.l.b16 %v1456
    %v1560 = vunpack.c.l.b16 %v1457
    %v1561 = vunpack.c.l.b16 %v1458
    %v1562 = vunpack.c.l.b16 %v1459
    %v1563 = vunpack.c.l.b16 %v1460
    %v1564 = vunpack.c.l.b16 %v1461
    %v1565 = vunpack.c.l.b16 %v1462
    %v1566 = vunpack.c.l.b16 %v1463
    %v1567 = vunpack.c.l.b16 %v1464
    %v1568 = vunpack.c.l.b16 %v1465
    %v1569 = vunpack.c.l.b16 %v1466
    %v1570 = vunpack.c.l.b16 %v1467
    %v1571 = vunpack.c.l.b16 %v1468
    %v1572 = vunpack.c.l.b16 %v1469
    %v1573 = vunpack.c.l.b16 %v1470
    %v1574 = vunpack.c.l.b16 %v1471
    %v1575 = vunpack.c.l.b16 %v1472
    %v1576 = vunpack.c.l.b16 %v1473
    %v1577 = vpack.c.b16 %v1530, %v1529
    %v1578 = vpack.c.b16 %v1532, %v1531
    %v1579 = vpack.c.b16 %v1534, %v1533
    %v1580 = vpack.c.b16 %v1536, %v1535
    %v1581 = vpack.c.b16 %v1538, %v1537
    %v1582 = vpack.c.b16 %v1540, %v1539
    %v1583 = vpack.c.b16 %v1542, %v1541
    %v1584 = vpack.c.b16 %v1544, %v1543
    %v1585 = vpack.c.b16 %v1546, %v1545
    %v1586 = vpack.c.b16 %v1548, %v1547
    %v1587 = vpack.c.b16 %v1550, %v1549
    %v1588 = vpack.c.b16 %v1552, %v1551
    %v1589 = vpack.c.b16 %v1554, %v1553
    %v1590 = vpack.c.b16 %v1556, %v1555
    %v1591 = vpack.c.b16 %v1558, %v1557
    %v1592 = vpack.c.b16 %v1560, %v1559
    %v1593 = vpack.c.b16 %v1562, %v1561
    %v1594 = vpack.c.b16 %v1564, %v1563
    %v1595 = vpack.c.b16 %v1566, %v1565
    %v1596 = vpack.c.b16 %v1568, %v1567
    %v1597 = vpack.c.b16 %v1570, %v1569
    %v1598 = vpack.c.b16 %v1572, %v1571
    %v1599 = vpack.c.b16 %v1574, %v1573
    %v1600 = vpack.c.b16 %v1576, %v1575
    %1625 = vmatprep.subr.bf16.mxu0 0
    %1626 = vmatpush1.bf16.msra.mxu0 %v1577
    %1627 = vmatprep.subr.bf16.mxu0 0
    %1628 = vmatpush1.bf16.msra.mxu0 %v1578
    %1629 = vmatprep.subr.bf16.mxu0 0
    %1630 = vmatpush1.bf16.msra.mxu0 %v1579
    %1631 = vmatprep.subr.bf16.mxu0 0
    %1632 = vmatpush1.bf16.msra.mxu0 %v1580
    %1633 = vmatprep.subr.bf16.mxu0 0
    %1634 = vmatpush1.bf16.msra.mxu0 %v1581
    %1635 = vmatprep.subr.bf16.mxu0 0
    %1636 = vmatpush1.bf16.msra.mxu0 %v1582
    %1637 = vmatprep.subr.bf16.mxu0 0
    %1638 = vmatpush1.bf16.msra.mxu0 %v1583
    %1639 = vmatprep.subr.bf16.mxu0 0
    %1640 = vmatpush1.bf16.msra.mxu0 %v1584
    %1641 = vmatprep.subr.bf16.mxu0 0
    %1642 = vmatpush1.bf16.msra.mxu0 %v1585
    %1643 = vmatprep.subr.bf16.mxu0 0
    %1644 = vmatpush1.bf16.msra.mxu0 %v1586
    %1645 = vmatprep.subr.bf16.mxu0 0
    %1646 = vmatpush1.bf16.msra.mxu0 %v1587
    %1647 = vmatprep.subr.bf16.mxu0 0
    %1648 = vmatpush1.bf16.msra.mxu0 %v1588
    %1649 = vmatprep.subr.bf16.mxu0 0
    %1650 = vmatpush1.bf16.msra.mxu0 %v1589
    %1651 = vmatprep.subr.bf16.mxu0 0
    %1652 = vmatpush1.bf16.msra.mxu0 %v1590
    %1653 = vmatprep.subr.bf16.mxu0 0
    %1654 = vmatpush1.bf16.msra.mxu0 %v1591
    %1655 = vmatprep.subr.bf16.mxu0 0
    %1656 = vmatpush1.bf16.msra.mxu0 %v1592
    %1657 = vmatprep.mubr.bf16.mxu0 %v1424
    %1658 = vmatmul.mubr.bf16.gmra.mrb[0].mxu0 %v1423
    %v1659 = vpop.f32.mrb[0].mxu0
    %v1660 = vadd.f32 %v1479, %v1659
    %v1661 = vpop.f32.mrb[0].mxu0
    %v1662 = vpop.f32.mrb[0].mxu0
    %v1663 = vadd.f32 %v1479, %v1662
    %v1664 = vpop.f32.mrb[0].mxu0
    %1665 = vdwg.mxu0
    %1666 = vmatprep.subr.bf16.mxu0 0
    %1667 = vmatpush1.bf16.msra.mxu0 %v1593
    %1668 = vmatprep.subr.bf16.mxu0 0
    %1669 = vmatpush1.bf16.msra.mxu0 %v1594
    %1670 = vmatprep.subr.bf16.mxu0 0
    %1671 = vmatpush1.bf16.msra.mxu0 %v1595
    %1672 = vmatprep.subr.bf16.mxu0 0
    %1673 = vmatpush1.bf16.msra.mxu0 %v1596
    %1674 = vmatprep.subr.bf16.mxu0 0
    %1675 = vmatpush1.bf16.msra.mxu0 %v1597
    %1676 = vmatprep.subr.bf16.mxu0 0
    %1677 = vmatpush1.bf16.msra.mxu0 %v1598
    %1678 = vmatprep.subr.bf16.mxu0 0
    %1679 = vmatpush1.bf16.msra.mxu0 %v1599
    %1680 = vmatprep.subr.bf16.mxu0 0
    %1681 = vmatpush1.bf16.msra.mxu0 %v1600
    %1682 = vmatprep.subr.bf16.mxu0 0
    %1683 = vmatpush1.bf16.msra.mxu0 0
    %1684 = vmatprep.subr.bf16.mxu0 0
    %1685 = vmatpush1.bf16.msra.mxu0 0
    %1686 = vmatprep.subr.bf16.mxu0 0
    %1687 = vmatpush1.bf16.msra.mxu0 0
    %1688 = vmatprep.subr.bf16.mxu0 0
    %1689 = vmatpush1.bf16.msra.mxu0 0
    %1690 = vmatprep.subr.bf16.mxu0 0
    %1691 = vmatpush1.bf16.msra.mxu0 0
    %1692 = vmatprep.subr.bf16.mxu0 0
    %1693 = vmatpush1.bf16.msra.mxu0 0
    %1694 = vmatprep.subr.bf16.mxu0 0
    %1695 = vmatpush1.bf16.msra.mxu0 0
    %1696 = vmatprep.subr.bf16.mxu0 0
    %1697 = vmatpush1.bf16.msra.mxu0 0
    %1698 = vmatprep.mubr.bf16.mxu0 0
    %1699 = vmatmul.mubr.bf16.gmra.mrb[0].mxu0 %v1425
    %v1700 = vpop.f32.mrb[0].mxu0
    %v1701 = vadd.f32 %v1660, %v1700
    %v1702 = vpop.f32.mrb[0].mxu0
    %v1703 = vpop.f32.mrb[0].mxu0
    %v1704 = vadd.f32 %v1663, %v1703
    %v1705 = vpop.f32.mrb[0].mxu0
    %1706 = vdwg.mxu0
    %v1707 = vmax.f32 %v1701, 0.0
    %v1708 = vmax.f32 %v1704, 0.0
    %v1709 = vpack.c.bf16 %v1708, %v1707
    %v1710 = vld [vmem:[%s5] sm:$0xff]
    %v1711 = vld [vmem:[%s5 + $0x8] sm:$0xf]
    %v1712 = vld [vmem:[%s5 + $0xc] sm:$0xff]
    %v1713 = vld [vmem:[%s5 + $0x14] sm:$0xf]
    %v1714 = vld [vmem:[%s5 + $0x18] sm:$0xff]
    %v1715 = vld [vmem:[%s5 + $0x20] sm:$0xf]
    %v1716 = vld [vmem:[%s5 + $0x24] sm:$0xff]
    %v1717 = vld [vmem:[%s5 + $0x2c] sm:$0xf]
    %v1718 = vld [vmem:[%s5 + $0x30] sm:$0xff]
    %v1719 = vld [vmem:[%s5 + $0x38] sm:$0xf]
    %v1720 = vld [vmem:[%s5 + $0x3c] sm:$0xff]
    %v1721 = vld [vmem:[%s5 + $0x44] sm:$0xf]
    %v1722 = vld [vmem:[%s5 + $0x48] sm:$0xff]
    %v1723 = vld [vmem:[%s5 + $0x50] sm:$0xf]
    %v1724 = vld [vmem:[%s5 + $0x54] sm:$0xff]
    %v1725 = vld [vmem:[%s5 + $0x5c] sm:$0xf]
    %v1726 = vld [vmem:[%s5 + $0x60] sm:$0xff]
    %v1727 = vld [vmem:[%s5 + $0x68] sm:$0xf]
    %v1728 = vld [vmem:[%s5 + $0x6c] sm:$0xff]
    %v1729 = vld [vmem:[%s5 + $0x74] sm:$0xf]
    %v1730 = vld [vmem:[%s5 + $0x78] sm:$0xff]
    %v1731 = vld [vmem:[%s5 + $0x80] sm:$0xf]
    %v1732 = vld [vmem:[%s5 + $0x84] sm:$0xff]
    %v1733 = vld [vmem:[%s5 + $0x8c] sm:$0xf]
    %v1734 = vld [vmem:[%s5 + $0x90] sm:$0xff]
    %v1735 = vld [vmem:[%s5 + $0x98] sm:$0xf]
    %v1736 = vld [vmem:[%s5 + $0x9c] sm:$0xff]
    %v1737 = vld [vmem:[%s5 + $0xa4] sm:$0xf]
    %v1738 = vld [vmem:[%s5 + $0xa8] sm:$0xff]
    %v1739 = vld [vmem:[%s5 + $0xb0] sm:$0xf]
    %v1740 = vld [vmem:[%s5 + $0xb4] sm:$0xff]
    %v1741 = vld [vmem:[%s5 + $0xbc] sm:$0xf]
    %v1742 = vld [vmem:[%s6] sm:$0x7]
    %v1744 = vlaneseq
    %v1745 = vshrl.u32 %v1744, 7
    %v1746 = vsub.s32 0, %v1745
    %v1747 = vrot.slane %v1742, %v1746
    %v1748 = vlaneseq
    %v1749 = vshrl.u32 %v1748, 7
    %v1750 = vsub.s32 1, %v1749
    %v1751 = vrot.slane %v1742, %v1750
    %v1752 = vlaneseq
    %v1753 = vshrl.u32 %v1752, 7
    %v1754 = vsub.s32 2, %v1753
    %v1755 = vrot.slane %v1742, %v1754
    %v1791 = vunpack.c.l.b16 %v1710
    %v1792 = vunpack.c.h.b16 %v1710
    %v1793 = vunpack.c.l.b16 %v1711
    %v1794 = vunpack.c.l.b16 %v1712
    %v1795 = vunpack.c.h.b16 %v1712
    %v1796 = vunpack.c.l.b16 %v1713
    %v1797 = vunpack.c.l.b16 %v1714
    %v1798 = vunpack.c.h.b16 %v1714
    %v1799 = vunpack.c.l.b16 %v1715
    %v1800 = vunpack.c.l.b16 %v1716
    %v1801 = vunpack.c.h.b16 %v1716
    %v1802 = vunpack.c.l.b16 %v1717
    %v1803 = vunpack.c.l.b16 %v1718
    %v1804 = vunpack.c.h.b16 %v1718
    %v1805 = vunpack.c.l.b16 %v1719
    %v1806 = vunpack.c.l.b16 %v1720
    %v1807 = vunpack.c.h.b16 %v1720
    %v1808 = vunpack.c.l.b16 %v1721
    %v1809 = vunpack.c.l.b16 %v1722
    %v1810 = vunpack.c.h.b16 %v1722
    %v1811 = vunpack.c.l.b16 %v1723
    %v1812 = vunpack.c.l.b16 %v1724
    %v1813 = vunpack.c.h.b16 %v1724
    %v1814 = vunpack.c.l.b16 %v1725
    %v1815 = vunpack.c.l.b16 %v1726
    %v1816 = vunpack.c.h.b16 %v1726
    %v1817 = vunpack.c.l.b16 %v1727
    %v1818 = vunpack.c.l.b16 %v1728
    %v1819 = vunpack.c.h.b16 %v1728
    %v1820 = vunpack.c.l.b16 %v1729
    %v1821 = vunpack.c.l.b16 %v1730
    %v1822 = vunpack.c.h.b16 %v1730
    %v1823 = vunpack.c.l.b16 %v1731
    %v1824 = vunpack.c.l.b16 %v1732
    %v1825 = vunpack.c.h.b16 %v1732
    %v1826 = vunpack.c.l.b16 %v1733
    %v1827 = vunpack.c.l.b16 %v1734
    %v1828 = vunpack.c.h.b16 %v1734
    %v1829 = vunpack.c.l.b16 %v1735
    %v1830 = vunpack.c.l.b16 %v1736
    %v1831 = vunpack.c.h.b16 %v1736
    %v1832 = vunpack.c.l.b16 %v1737
    %v1833 = vunpack.c.l.b16 %v1738
    %v1834 = vunpack.c.h.b16 %v1738
    %v1835 = vunpack.c.l.b16 %v1739
    %v1836 = vunpack.c.l.b16 %v1740
    %v1837 = vunpack.c.h.b16 %v1740
    %v1838 = vunpack.c.l.b16 %v1741
    %v1839 = vpack.c.b16 %v1794, %v1791
    %v1840 = vpack.c.b16 %v1795, %v1792
    %v1841 = vpack.c.b16 %v1796, %v1793
    %v1842 = vpack.c.b16 %v1800, %v1797
    %v1843 = vpack.c.b16 %v1801, %v1798
    %v1844 = vpack.c.b16 %v1802, %v1799
    %v1845 = vpack.c.b16 %v1806, %v1803
    %v1846 = vpack.c.b16 %v1807, %v1804
    %v1847 = vpack.c.b16 %v1808, %v1805
    %v1848 = vpack.c.b16 %v1812, %v1809
    %v1849 = vpack.c.b16 %v1813, %v1810
    %v1850 = vpack.c.b16 %v1814, %v1811
    %v1851 = vpack.c.b16 %v1818, %v1815
    %v1852 = vpack.c.b16 %v1819, %v1816
    %v1853 = vpack.c.b16 %v1820, %v1817
    %v1854 = vpack.c.b16 %v1824, %v1821
    %v1855 = vpack.c.b16 %v1825, %v1822
    %v1856 = vpack.c.b16 %v1826, %v1823
    %v1857 = vpack.c.b16 %v1830, %v1827
    %v1858 = vpack.c.b16 %v1831, %v1828
    %v1859 = vpack.c.b16 %v1832, %v1829
    %v1860 = vpack.c.b16 %v1836, %v1833
    %v1861 = vpack.c.b16 %v1837, %v1834
    %v1862 = vpack.c.b16 %v1838, %v1835
    %1887 = vmatprep.subr.bf16.mxu0 %v1840
    %1888 = vmatpush1.bf16.msra.mxu0 %v1839
    %1889 = vmatprep.subr.bf16.mxu0 %v1843
    %1890 = vmatpush1.bf16.msra.mxu0 %v1842
    %1891 = vmatprep.subr.bf16.mxu0 %v1846
    %1892 = vmatpush1.bf16.msra.mxu0 %v1845
    %1893 = vmatprep.subr.bf16.mxu0 %v1849
    %1894 = vmatpush1.bf16.msra.mxu0 %v1848
    %1895 = vmatprep.subr.bf16.mxu0 %v1852
    %1896 = vmatpush1.bf16.msra.mxu0 %v1851
    %1897 = vmatprep.subr.bf16.mxu0 %v1855
    %1898 = vmatpush1.bf16.msra.mxu0 %v1854
    %1899 = vmatprep.subr.bf16.mxu0 %v1858
    %1900 = vmatpush1.bf16.msra.mxu0 %v1857
    %1901 = vmatprep.subr.bf16.mxu0 %v1861
    %1902 = vmatpush1.bf16.msra.mxu0 %v1860
    %1903 = vmatprep.subr.bf16.mxu0 0
    %1904 = vmatpush1.bf16.msra.mxu0 0
    %1905 = vmatprep.subr.bf16.mxu0 0
    %1906 = vmatpush1.bf16.msra.mxu0 0
    %1907 = vmatprep.subr.bf16.mxu0 0
    %1908 = vmatpush1.bf16.msra.mxu0 0
    %1909 = vmatprep.subr.bf16.mxu0 0
    %1910 = vmatpush1.bf16.msra.mxu0 0
    %1911 = vmatprep.subr.bf16.mxu0 0
    %1912 = vmatpush1.bf16.msra.mxu0 0
    %1913 = vmatprep.subr.bf16.mxu0 0
    %1914 = vmatpush1.bf16.msra.mxu0 0
    %1915 = vmatprep.subr.bf16.mxu0 0
    %1916 = vmatpush1.bf16.msra.mxu0 0
    %1917 = vmatprep.subr.bf16.mxu0 0
    %1918 = vmatpush1.bf16.msra.mxu0 0
    %1919 = vmatprep.mubr.bf16.mxu0 0
    %1920 = vmatmul.mubr.bf16.gmra.mrb[0].mxu0 %v1709
    %v1921 = vpop.f32.mrb[0].mxu0
    %v1922 = vadd.f32 %v1747, %v1921
    %v1923 = vpop.f32.mrb[0].mxu0
    %v1924 = vadd.f32 %v1751, %v1923
    %v1925 = vpop.f32.mrb[0].mxu0
    %v1926 = vadd.f32 %v1747, %v1925
    %v1927 = vpop.f32.mrb[0].mxu0
    %v1928 = vadd.f32 %v1751, %v1927
    %1929 = vdwg.mxu0
    %1930 = vmatprep.subr.bf16.mxu0 0
    %1931 = vmatpush1.bf16.msra.mxu0 %v1841
    %1932 = vmatprep.subr.bf16.mxu0 0
    %1933 = vmatpush1.bf16.msra.mxu0 %v1844
    %1934 = vmatprep.subr.bf16.mxu0 0
    %1935 = vmatpush1.bf16.msra.mxu0 %v1847
    %1936 = vmatprep.subr.bf16.mxu0 0
    %1937 = vmatpush1.bf16.msra.mxu0 %v1850
    %1938 = vmatprep.subr.bf16.mxu0 0
    %1939 = vmatpush1.bf16.msra.mxu0 %v1853
    %1940 = vmatprep.subr.bf16.mxu0 0
    %1941 = vmatpush1.bf16.msra.mxu0 %v1856
    %1942 = vmatprep.subr.bf16.mxu0 0
    %1943 = vmatpush1.bf16.msra.mxu0 %v1859
    %1944 = vmatprep.subr.bf16.mxu0 0
    %1945 = vmatpush1.bf16.msra.mxu0 %v1862
    %1946 = vmatprep.subr.bf16.mxu0 0
    %1947 = vmatpush1.bf16.msra.mxu0 0
    %1948 = vmatprep.subr.bf16.mxu0 0
    %1949 = vmatpush1.bf16.msra.mxu0 0
    %1950 = vmatprep.subr.bf16.mxu0 0
    %1951 = vmatpush1.bf16.msra.mxu0 0
    %1952 = vmatprep.subr.bf16.mxu0 0
    %1953 = vmatpush1.bf16.msra.mxu0 0
    %1954 = vmatprep.subr.bf16.mxu0 0
    %1955 = vmatpush1.bf16.msra.mxu0 0
    %1956 = vmatprep.subr.bf16.mxu0 0
    %1957 = vmatpush1.bf16.msra.mxu0 0
    %1958 = vmatprep.subr.bf16.mxu0 0
    %1959 = vmatpush1.bf16.msra.mxu0 0
    %1960 = vmatprep.subr.bf16.mxu0 0
    %1961 = vmatpush1.bf16.msra.mxu0 0
    %1962 = vmatprep.mubr.bf16.mxu0 0
    %1963 = vmatmul.mubr.bf16.gmra.mrb[0].mxu0 %v1709
    %v1964 = vpop.f32.mrb[0].mxu0
    %v1965 = vadd.f32 %v1755, %v1964
    %v1966 = vpop.f32.mrb[0].mxu0
    %v1967 = vpop.f32.mrb[0].mxu0
    %v1968 = vadd.f32 %v1755, %v1967
    %v1969 = vpop.f32.mrb[0].mxu0
    %1970 = vdwg.mxu0
    %v1971 = vmax.f32 %v1922, 0.0
    %v1972 = vmax.f32 %v1924, 0.0
    %v1973 = vmax.f32 %v1965, 0.0
    %v1974 = vmax.f32 %v1926, 0.0
    %v1975 = vmax.f32 %v1928, 0.0
    %v1976 = vmax.f32 %v1968, 0.0
    %v1977 = vpack.c.bf16 %v1974, %v1971
    %v1978 = vpack.c.bf16 %v1975, %v1972
    %v1979 = vpack.c.bf16 %v1976, %v1973
    %v1980 = vld [vmem:[%s7] sm:$0xff]
    %v1981 = vld [vmem:[%s7 + $0x8] sm:$0xff]
    %v1982 = vld [vmem:[%s7 + $0x10] sm:$0xff]
    %v1983 = vld [vmem:[%s7 + $0x18] sm:$0xf]
    %v1984 = vld [vmem:[%s7 + $0x1c] sm:$0xff]
    %v1985 = vld [vmem:[%s7 + $0x24] sm:$0xff]
    %v1986 = vld [vmem:[%s7 + $0x2c] sm:$0xff]
    %v1987 = vld [vmem:[%s7 + $0x34] sm:$0xf]
    %v1988 = vld [vmem:[%s7 + $0x38] sm:$0xff]
    %v1989 = vld [vmem:[%s7 + $0x40] sm:$0xff]
    %v1990 = vld [vmem:[%s7 + $0x48] sm:$0xff]
    %v1991 = vld [vmem:[%s7 + $0x50] sm:$0xf]
    %v1992 = vld [vmem:[%s7 + $0x54] sm:$0xff]
    %v1993 = vld [vmem:[%s7 + $0x5c] sm:$0xff]
    %v1994 = vld [vmem:[%s7 + $0x64] sm:$0xff]
    %v1995 = vld [vmem:[%s7 + $0x6c] sm:$0xf]
    %v1996 = vld [vmem:[%s7 + $0x70] sm:$0xff]
    %v1997 = vld [vmem:[%s7 + $0x78] sm:$0xff]
    %v1998 = vld [vmem:[%s7 + $0x80] sm:$0xff]
    %v1999 = vld [vmem:[%s7 + $0x88] sm:$0xf]
    %v2000 = vld [vmem:[%s7 + $0x8c] sm:$0xff]
    %v2001 = vld [vmem:[%s7 + $0x94] sm:$0xff]
    %v2002 = vld [vmem:[%s7 + $0x9c] sm:$0xff]
    %v2003 = vld [vmem:[%s7 + $0xa4] sm:$0xf]
    %v2004 = vld [vmem:[%s7 + $0xa8] sm:$0xff]
    %v2005 = vld [vmem:[%s7 + $0xb0] sm:$0xff]
    %v2006 = vld [vmem:[%s7 + $0xb8] sm:$0xff]
    %v2007 = vld [vmem:[%s7 + $0xc0] sm:$0xf]
    %v2008 = vld [vmem:[%s7 + $0xc4] sm:$0xff]
    %v2009 = vld [vmem:[%s7 + $0xcc] sm:$0xff]
    %v2010 = vld [vmem:[%s7 + $0xd4] sm:$0xff]
    %v2011 = vld [vmem:[%s7 + $0xdc] sm:$0xf]
    %v2012 = vld [vmem:[%s7 + $0xe0] sm:$0xff]
    %v2013 = vld [vmem:[%s7 + $0xe8] sm:$0xff]
    %v2014 = vld [vmem:[%s7 + $0xf0] sm:$0xff]
    %v2015 = vld [vmem:[%s7 + $0xf8] sm:$0xf]
    %v2016 = vld [vmem:[%s7 + $0xfc] sm:$0xff]
    %v2017 = vld [vmem:[%s7 + $0x104] sm:$0xff]
    %v2018 = vld [vmem:[%s7 + $0x10c] sm:$0xff]
    %v2019 = vld [vmem:[%s7 + $0x114] sm:$0xf]
    %v2020 = vld [vmem:[%s7 + $0x118] sm:$0xff]
    %v2021 = vld [vmem:[%s7 + $0x120] sm:$0xff]
    %v2022 = vld [vmem:[%s7 + $0x128] sm:$0xff]
    %v2023 = vld [vmem:[%s7 + $0x130] sm:$0xf]
    %v2024 = vld [vmem:[%s7 + $0x134] sm:$0xff]
    %v2025 = vld [vmem:[%s7 + $0x13c] sm:$0xff]
    %v2026 = vld [vmem:[%s7 + $0x144] sm:$0xff]
    %v2027 = vld [vmem:[%s7 + $0x14c] sm:$0xf]
    %v2028 = vld [vmem:[%s7 + $0x150] sm:$0xff]
    %v2029 = vld [vmem:[%s7 + $0x158] sm:$0xff]
    %v2030 = vld [vmem:[%s7 + $0x160] sm:$0xff]
    %v2031 = vld [vmem:[%s7 + $0x168] sm:$0xf]
    %v2032 = vld [vmem:[%s7 + $0x16c] sm:$0xff]
    %v2033 = vld [vmem:[%s7 + $0x174] sm:$0xff]
    %v2034 = vld [vmem:[%s7 + $0x17c] sm:$0xff]
    %v2035 = vld [vmem:[%s7 + $0x184] sm:$0xf]
    %v2036 = vld [vmem:[%s7 + $0x188] sm:$0xff]
    %v2037 = vld [vmem:[%s7 + $0x190] sm:$0xff]
    %v2038 = vld [vmem:[%s7 + $0x198] sm:$0xff]
    %v2039 = vld [vmem:[%s7 + $0x1a0] sm:$0xf]
    %v2040 = vld [vmem:[%s7 + $0x1a4] sm:$0xff]
    %v2041 = vld [vmem:[%s7 + $0x1ac] sm:$0xff]
    %v2042 = vld [vmem:[%s7 + $0x1b4] sm:$0xff]
    %v2043 = vld [vmem:[%s7 + $0x1bc] sm:$0xf]
    %v2044 = vld [vmem:[%s7 + $0x1c0] sm:$0xff]
    %v2045 = vld [vmem:[%s7 + $0x1c8] sm:$0xff]
    %v2046 = vld [vmem:[%s7 + $0x1d0] sm:$0xff]
    %v2047 = vld [vmem:[%s7 + $0x1d8] sm:$0xf]
    %v2048 = vld [vmem:[%s7 + $0x1dc] sm:$0xff]
    %v2049 = vld [vmem:[%s7 + $0x1e4] sm:$0xff]
    %v2050 = vld [vmem:[%s7 + $0x1ec] sm:$0xff]
    %v2051 = vld [vmem:[%s7 + $0x1f4] sm:$0xf]
    %v2052 = vld [vmem:[%s7 + $0x1f8] sm:$0xff]
    %v2053 = vld [vmem:[%s7 + $0x200] sm:$0xff]
    %v2054 = vld [vmem:[%s7 + $0x208] sm:$0xff]
    %v2055 = vld [vmem:[%s7 + $0x210] sm:$0xf]
    %v2056 = vld [vmem:[%s7 + $0x214] sm:$0xff]
    %v2057 = vld [vmem:[%s7 + $0x21c] sm:$0xff]
    %v2058 = vld [vmem:[%s7 + $0x224] sm:$0xff]
    %v2059 = vld [vmem:[%s7 + $0x22c] sm:$0xf]
    %v2060 = vld [vmem:[%s7 + $0x230] sm:$0xff]
    %v2061 = vld [vmem:[%s7 + $0x238] sm:$0xff]
    %v2062 = vld [vmem:[%s7 + $0x240] sm:$0xff]
    %v2063 = vld [vmem:[%s7 + $0x248] sm:$0xf]
    %v2064 = vld [vmem:[%s7 + $0x24c] sm:$0xff]
    %v2065 = vld [vmem:[%s7 + $0x254] sm:$0xff]
    %v2066 = vld [vmem:[%s7 + $0x25c] sm:$0xff]
    %v2067 = vld [vmem:[%s7 + $0x264] sm:$0xf]
    %v2068 = vld [vmem:[%s7 + $0x268] sm:$0xff]
    %v2069 = vld [vmem:[%s7 + $0x270] sm:$0xff]
    %v2070 = vld [vmem:[%s7 + $0x278] sm:$0xff]
    %v2071 = vld [vmem:[%s7 + $0x280] sm:$0xf]
    %v2072 = vld [vmem:[%s7 + $0x284] sm:$0xff]
    %v2073 = vld [vmem:[%s7 + $0x28c] sm:$0xff]
    %v2074 = vld [vmem:[%s7 + $0x294] sm:$0xff]
    %v2075 = vld [vmem:[%s7 + $0x29c] sm:$0xf]
    %v2076 = vld [vmem:[%s7 + $0x2a0] sm:$0xff]
    %v2077 = vld [vmem:[%s7 + $0x2a8] sm:$0xff]
    %v2078 = vld [vmem:[%s7 + $0x2b0] sm:$0xff]
    %v2079 = vld [vmem:[%s7 + $0x2b8] sm:$0xf]
    %v2080 = vld [vmem:[%s7 + $0x2bc] sm:$0xff]
    %v2081 = vld [vmem:[%s7 + $0x2c4] sm:$0xff]
    %v2082 = vld [vmem:[%s7 + $0x2cc] sm:$0xff]
    %v2083 = vld [vmem:[%s7 + $0x2d4] sm:$0xf]
    %v2084 = vld [vmem:[%s7 + $0x2d8] sm:$0xff]
    %v2085 = vld [vmem:[%s7 + $0x2e0] sm:$0xff]
    %v2086 = vld [vmem:[%s7 + $0x2e8] sm:$0xff]
    %v2087 = vld [vmem:[%s7 + $0x2f0] sm:$0xf]
    %v2088 = vld [vmem:[%s7 + $0x2f4] sm:$0xff]
    %v2089 = vld [vmem:[%s7 + $0x2fc] sm:$0xff]
    %v2090 = vld [vmem:[%s7 + $0x304] sm:$0xff]
    %v2091 = vld [vmem:[%s7 + $0x30c] sm:$0xf]
    %v2092 = vld [vmem:[%s7 + $0x310] sm:$0xff]
    %v2093 = vld [vmem:[%s7 + $0x318] sm:$0xff]
    %v2094 = vld [vmem:[%s7 + $0x320] sm:$0xff]
    %v2095 = vld [vmem:[%s7 + $0x328] sm:$0xf]
    %v2096 = vld [vmem:[%s7 + $0x32c] sm:$0xff]
    %v2097 = vld [vmem:[%s7 + $0x334] sm:$0xff]
    %v2098 = vld [vmem:[%s7 + $0x33c] sm:$0xff]
    %v2099 = vld [vmem:[%s7 + $0x344] sm:$0xf]
    %v2100 = vld [vmem:[%s7 + $0x348] sm:$0xff]
    %v2101 = vld [vmem:[%s7 + $0x350] sm:$0xff]
    %v2102 = vld [vmem:[%s7 + $0x358] sm:$0xff]
    %v2103 = vld [vmem:[%s7 + $0x360] sm:$0xf]
    %v2104 = vld [vmem:[%s7 + $0x364] sm:$0xff]
    %v2105 = vld [vmem:[%s7 + $0x36c] sm:$0xff]
    %v2106 = vld [vmem:[%s7 + $0x374] sm:$0xff]
    %v2107 = vld [vmem:[%s7 + $0x37c] sm:$0xf]
    %v2108 = vld [vmem:[%s7 + $0x380] sm:$0xff]
    %v2109 = vld [vmem:[%s7 + $0x388] sm:$0xff]
    %v2110 = vld [vmem:[%s7 + $0x390] sm:$0xff]
    %v2111 = vld [vmem:[%s7 + $0x398] sm:$0xf]
    %v2112 = vld [vmem:[%s7 + $0x39c] sm:$0xff]
    %v2113 = vld [vmem:[%s7 + $0x3a4] sm:$0xff]
    %v2114 = vld [vmem:[%s7 + $0x3ac] sm:$0xff]
    %v2115 = vld [vmem:[%s7 + $0x3b4] sm:$0xf]
    %v2116 = vld [vmem:[%s7 + $0x3b8] sm:$0xff]
    %v2117 = vld [vmem:[%s7 + $0x3c0] sm:$0xff]
    %v2118 = vld [vmem:[%s7 + $0x3c8] sm:$0xff]
    %v2119 = vld [vmem:[%s7 + $0x3d0] sm:$0xf]
    %v2120 = vld [vmem:[%s7 + $0x3d4] sm:$0xff]
    %v2121 = vld [vmem:[%s7 + $0x3dc] sm:$0xff]
    %v2122 = vld [vmem:[%s7 + $0x3e4] sm:$0xff]
    %v2123 = vld [vmem:[%s7 + $0x3ec] sm:$0xf]
    %v2124 = vld [vmem:[%s7 + $0x3f0] sm:$0xff]
    %v2125 = vld [vmem:[%s7 + $0x3f8] sm:$0xff]
    %v2126 = vld [vmem:[%s7 + $0x400] sm:$0xff]
    %v2127 = vld [vmem:[%s7 + $0x408] sm:$0xf]
    %v2128 = vld [vmem:[%s7 + $0x40c] sm:$0xff]
    %v2129 = vld [vmem:[%s7 + $0x414] sm:$0xff]
    %v2130 = vld [vmem:[%s7 + $0x41c] sm:$0xff]
    %v2131 = vld [vmem:[%s7 + $0x424] sm:$0xf]
    %v2132 = vld [vmem:[%s7 + $0x428] sm:$0xff]
    %v2133 = vld [vmem:[%s7 + $0x430] sm:$0xff]
    %v2134 = vld [vmem:[%s7 + $0x438] sm:$0xff]
    %v2135 = vld [vmem:[%s7 + $0x440] sm:$0xf]
    %v2136 = vld [vmem:[%s7 + $0x444] sm:$0xff]
    %v2137 = vld [vmem:[%s7 + $0x44c] sm:$0xff]
    %v2138 = vld [vmem:[%s7 + $0x454] sm:$0xff]
    %v2139 = vld [vmem:[%s7 + $0x45c] sm:$0xf]
    %v2140 = vld [vmem:[%s7 + $0x460] sm:$0xff]
    %v2141 = vld [vmem:[%s7 + $0x468] sm:$0xff]
    %v2142 = vld [vmem:[%s7 + $0x470] sm:$0xff]
    %v2143 = vld [vmem:[%s7 + $0x478] sm:$0xf]
    %v2144 = vld [vmem:[%s7 + $0x47c] sm:$0xff]
    %v2145 = vld [vmem:[%s7 + $0x484] sm:$0xff]
    %v2146 = vld [vmem:[%s7 + $0x48c] sm:$0xff]
    %v2147 = vld [vmem:[%s7 + $0x494] sm:$0xf]
    %v2148 = vld [vmem:[%s7 + $0x498] sm:$0xff]
    %v2149 = vld [vmem:[%s7 + $0x4a0] sm:$0xff]
    %v2150 = vld [vmem:[%s7 + $0x4a8] sm:$0xff]
    %v2151 = vld [vmem:[%s7 + $0x4b0] sm:$0xf]
    %v2152 = vld [vmem:[%s7 + $0x4b4] sm:$0xff]
    %v2153 = vld [vmem:[%s7 + $0x4bc] sm:$0xff]
    %v2154 = vld [vmem:[%s7 + $0x4c4] sm:$0xff]
    %v2155 = vld [vmem:[%s7 + $0x4cc] sm:$0xf]
    %v2156 = vld [vmem:[%s7 + $0x4d0] sm:$0xff]
    %v2157 = vld [vmem:[%s7 + $0x4d8] sm:$0xff]
    %v2158 = vld [vmem:[%s7 + $0x4e0] sm:$0xff]
    %v2159 = vld [vmem:[%s7 + $0x4e8] sm:$0xf]
    %v2160 = vld [vmem:[%s7 + $0x4ec] sm:$0xff]
    %v2161 = vld [vmem:[%s7 + $0x4f4] sm:$0xff]
    %v2162 = vld [vmem:[%s7 + $0x4fc] sm:$0xff]
    %v2163 = vld [vmem:[%s7 + $0x504] sm:$0xf]
    %v2164 = vld [vmem:[%s7 + $0x508] sm:$0xff]
    %v2165 = vld [vmem:[%s7 + $0x510] sm:$0xff]
    %v2166 = vld [vmem:[%s7 + $0x518] sm:$0xff]
    %v2167 = vld [vmem:[%s7 + $0x520] sm:$0xf]
    %v2168 = vld [vmem:[%s7 + $0x524] sm:$0xff]
    %v2169 = vld [vmem:[%s7 + $0x52c] sm:$0xff]
    %v2170 = vld [vmem:[%s7 + $0x534] sm:$0xff]
    %v2171 = vld [vmem:[%s7 + $0x53c] sm:$0xf]
    %v2172 = vld [vmem:[%s8] sm:$0x7f]
    %v2174 = vlaneseq
    %v2175 = vshrl.u32 %v2174, 7
    %v2176 = vsub.s32 0, %v2175
    %v2177 = vrot.slane %v2172, %v2176
    %v2178 = vlaneseq
    %v2179 = vshrl.u32 %v2178, 7
    %v2180 = vsub.s32 1, %v2179
    %v2181 = vrot.slane %v2172, %v2180
    %v2182 = vlaneseq
    %v2183 = vshrl.u32 %v2182, 7
    %v2184 = vsub.s32 2, %v2183
    %v2185 = vrot.slane %v2172, %v2184
    %v2186 = vlaneseq
    %v2187 = vshrl.u32 %v2186, 7
    %v2188 = vsub.s32 3, %v2187
    %v2189 = vrot.slane %v2172, %v2188
    %v2190 = vlaneseq
    %v2191 = vshrl.u32 %v2190, 7
    %v2192 = vsub.s32 4, %v2191
    %v2193 = vrot.slane %v2172, %v2192
    %v2194 = vlaneseq
    %v2195 = vshrl.u32 %v2194, 7
    %v2196 = vsub.s32 5, %v2195
    %v2197 = vrot.slane %v2172, %v2196
    %v2198 = vlaneseq
    %v2199 = vshrl.u32 %v2198, 7
    %v2200 = vsub.s32 6, %v2199
    %v2201 = vrot.slane %v2172, %v2200
    %v2401 = vunpack.c.l.b16 %v1980
    %v2402 = vunpack.c.h.b16 %v1980
    %v2403 = vunpack.c.l.b16 %v1981
    %v2404 = vunpack.c.h.b16 %v1981
    %v2405 = vunpack.c.l.b16 %v1982
    %v2406 = vunpack.c.h.b16 %v1982
    %v2407 = vunpack.c.l.b16 %v1983
    %v2408 = vunpack.c.l.b16 %v1984
    %v2409 = vunpack.c.h.b16 %v1984
    %v2410 = vunpack.c.l.b16 %v1985
    %v2411 = vunpack.c.h.b16 %v1985
    %v2412 = vunpack.c.l.b16 %v1986
    %v2413 = vunpack.c.h.b16 %v1986
    %v2414 = vunpack.c.l.b16 %v1987
    %v2415 = vunpack.c.l.b16 %v1988
    %v2416 = vunpack.c.h.b16 %v1988
    %v2417 = vunpack.c.l.b16 %v1989
    %v2418 = vunpack.c.h.b16 %v1989
    %v2419 = vunpack.c.l.b16 %v1990
    %v2420 = vunpack.c.h.b16 %v1990
    %v2421 = vunpack.c.l.b16 %v1991
    %v2422 = vunpack.c.l.b16 %v1992
    %v2423 = vunpack.c.h.b16 %v1992
    %v2424 = vunpack.c.l.b16 %v1993
    %v2425 = vunpack.c.h.b16 %v1993
    %v2426 = vunpack.c.l.b16 %v1994
    %v2427 = vunpack.c.h.b16 %v1994
    %v2428 = vunpack.c.l.b16 %v1995
    %v2429 = vunpack.c.l.b16 %v1996
    %v2430 = vunpack.c.h.b16 %v1996
    %v2431 = vunpack.c.l.b16 %v1997
    %v2432 = vunpack.c.h.b16 %v1997
    %v2433 = vunpack.c.l.b16 %v1998
    %v2434 = vunpack.c.h.b16 %v1998
    %v2435 = vunpack.c.l.b16 %v1999
    %v2436 = vunpack.c.l.b16 %v2000
    %v2437 = vunpack.c.h.b16 %v2000
    %v2438 = vunpack.c.l.b16 %v2001
    %v2439 = vunpack.c.h.b16 %v2001
    %v2440 = vunpack.c.l.b16 %v2002
    %v2441 = vunpack.c.h.b16 %v2002
    %v2442 = vunpack.c.l.b16 %v2003
    %v2443 = vunpack.c.l.b16 %v2004
    %v2444 = vunpack.c.h.b16 %v2004
    %v2445 = vunpack.c.l.b16 %v2005
    %v2446 = vunpack.c.h.b16 %v2005
    %v2447 = vunpack.c.l.b16 %v2006
    %v2448 = vunpack.c.h.b16 %v2006
    %v2449 = vunpack.c.l.b16 %v2007
    %v2450 = vunpack.c.l.b16 %v2008
    %v2451 = vunpack.c.h.b16 %v2008
    %v2452 = vunpack.c.l.b16 %v2009
    %v2453 = vunpack.c.h.b16 %v2009
    %v2454 = vunpack.c.l.b16 %v2010
    %v2455 = vunpack.c.h.b16 %v2010
    %v2456 = vunpack.c.l.b16 %v2011
    %v2457 = vunpack.c.l.b16 %v2012
    %v2458 = vunpack.c.h.b16 %v2012
    %v2459 = vunpack.c.l.b16 %v2013
    %v2460 = vunpack.c.h.b16 %v2013
    %v2461 = vunpack.c.l.b16 %v2014
    %v2462 = vunpack.c.h.b16 %v2014
    %v2463 = vunpack.c.l.b16 %v2015
    %v2464 = vunpack.c.l.b16 %v2016
    %v2465 = vunpack.c.h.b16 %v2016
    %v2466 = vunpack.c.l.b16 %v2017
    %v2467 = vunpack.c.h.b16 %v2017
    %v2468 = vunpack.c.l.b16 %v2018
    %v2469 = vunpack.c.h.b16 %v2018
    %v2470 = vunpack.c.l.b16 %v2019
    %v2471 = vunpack.c.l.b16 %v2020
    %v2472 = vunpack.c.h.b16 %v2020
    %v2473 = vunpack.c.l.b16 %v2021
    %v2474 = vunpack.c.h.b16 %v2021
    %v2475 = vunpack.c.l.b16 %v2022
    %v2476 = vunpack.c.h.b16 %v2022
    %v2477 = vunpack.c.l.b16 %v2023
    %v2478 = vunpack.c.l.b16 %v2024
    %v2479 = vunpack.c.h.b16 %v2024
    %v2480 = vunpack.c.l.b16 %v2025
    %v2481 = vunpack.c.h.b16 %v2025
    %v2482 = vunpack.c.l.b16 %v2026
    %v2483 = vunpack.c.h.b16 %v2026
    %v2484 = vunpack.c.l.b16 %v2027
    %v2485 = vunpack.c.l.b16 %v2028
    %v2486 = vunpack.c.h.b16 %v2028
    %v2487 = vunpack.c.l.b16 %v2029
    %v2488 = vunpack.c.h.b16 %v2029
    %v2489 = vunpack.c.l.b16 %v2030
    %v2490 = vunpack.c.h.b16 %v2030
    %v2491 = vunpack.c.l.b16 %v2031
    %v2492 = vunpack.c.l.b16 %v2032
    %v2493 = vunpack.c.h.b16 %v2032
    %v2494 = vunpack.c.l.b16 %v2033
    %v2495 = vunpack.c.h.b16 %v2033
    %v2496 = vunpack.c.l.b16 %v2034
    %v2497 = vunpack.c.h.b16 %v2034
    %v2498 = vunpack.c.l.b16 %v2035
    %v2499 = vunpack.c.l.b16 %v2036
    %v2500 = vunpack.c.h.b16 %v2036
    %v2501 = vunpack.c.l.b16 %v2037
    %v2502 = vunpack.c.h.b16 %v2037
    %v2503 = vunpack.c.l.b16 %v2038
    %v2504 = vunpack.c.h.b16 %v2038
    %v2505 = vunpack.c.l.b16 %v2039
    %v2506 = vunpack.c.l.b16 %v2040
    %v2507 = vunpack.c.h.b16 %v2040
    %v2508 = vunpack.c.l.b16 %v2041
    %v2509 = vunpack.c.h.b16 %v2041
    %v2510 = vunpack.c.l.b16 %v2042
    %v2511 = vunpack.c.h.b16 %v2042
    %v2512 = vunpack.c.l.b16 %v2043
    %v2513 = vunpack.c.l.b16 %v2044
    %v2514 = vunpack.c.h.b16 %v2044
    %v2515 = vunpack.c.l.b16 %v2045
    %v2516 = vunpack.c.h.b16 %v2045
    %v2517 = vunpack.c.l.b16 %v2046
    %v2518 = vunpack.c.h.b16 %v2046
    %v2519 = vunpack.c.l.b16 %v2047
    %v2520 = vunpack.c.l.b16 %v2048
    %v2521 = vunpack.c.h.b16 %v2048
    %v2522 = vunpack.c.l.b16 %v2049
    %v2523 = vunpack.c.h.b16 %v2049
    %v2524 = vunpack.c.l.b16 %v2050
    %v2525 = vunpack.c.h.b16 %v2050
    %v2526 = vunpack.c.l.b16 %v2051
    %v2527 = vunpack.c.l.b16 %v2052
    %v2528 = vunpack.c.h.b16 %v2052
    %v2529 = vunpack.c.l.b16 %v2053
    %v2530 = vunpack.c.h.b16 %v2053
    %v2531 = vunpack.c.l.b16 %v2054
    %v2532 = vunpack.c.h.b16 %v2054
    %v2533 = vunpack.c.l.b16 %v2055
    %v2534 = vunpack.c.l.b16 %v2056
    %v2535 = vunpack.c.h.b16 %v2056
    %v2536 = vunpack.c.l.b16 %v2057
    %v2537 = vunpack.c.h.b16 %v2057
    %v2538 = vunpack.c.l.b16 %v2058
    %v2539 = vunpack.c.h.b16 %v2058
    %v2540 = vunpack.c.l.b16 %v2059
    %v2541 = vunpack.c.l.b16 %v2060
    %v2542 = vunpack.c.h.b16 %v2060
    %v2543 = vunpack.c.l.b16 %v2061
    %v2544 = vunpack.c.h.b16 %v2061
    %v2545 = vunpack.c.l.b16 %v2062
    %v2546 = vunpack.c.h.b16 %v2062
    %v2547 = vunpack.c.l.b16 %v2063
    %v2548 = vunpack.c.l.b16 %v2064
    %v2549 = vunpack.c.h.b16 %v2064
    %v2550 = vunpack.c.l.b16 %v2065
    %v2551 = vunpack.c.h.b16 %v2065
    %v2552 = vunpack.c.l.b16 %v2066
    %v2553 = vunpack.c.h.b16 %v2066
    %v2554 = vunpack.c.l.b16 %v2067
    %v2555 = vunpack.c.l.b16 %v2068
    %v2556 = vunpack.c.h.b16 %v2068
    %v2557 = vunpack.c.l.b16 %v2069
    %v2558 = vunpack.c.h.b16 %v2069
    %v2559 = vunpack.c.l.b16 %v2070
    %v2560 = vunpack.c.h.b16 %v2070
    %v2561 = vunpack.c.l.b16 %v2071
    %v2562 = vunpack.c.l.b16 %v2072
    %v2563 = vunpack.c.h.b16 %v2072
    %v2564 = vunpack.c.l.b16 %v2073
    %v2565 = vunpack.c.h.b16 %v2073
    %v2566 = vunpack.c.l.b16 %v2074
    %v2567 = vunpack.c.h.b16 %v2074
    %v2568 = vunpack.c.l.b16 %v2075
    %v2569 = vunpack.c.l.b16 %v2076
    %v2570 = vunpack.c.h.b16 %v2076
    %v2571 = vunpack.c.l.b16 %v2077
    %v2572 = vunpack.c.h.b16 %v2077
    %v2573 = vunpack.c.l.b16 %v2078
    %v2574 = vunpack.c.h.b16 %v2078
    %v2575 = vunpack.c.l.b16 %v2079
    %v2576 = vunpack.c.l.b16 %v2080
    %v2577 = vunpack.c.h.b16 %v2080
    %v2578 = vunpack.c.l.b16 %v2081
    %v2579 = vunpack.c.h.b16 %v2081
    %v2580 = vunpack.c.l.b16 %v2082
    %v2581 = vunpack.c.h.b16 %v2082
    %v2582 = vunpack.c.l.b16 %v2083
    %v2583 = vunpack.c.l.b16 %v2084
    %v2584 = vunpack.c.h.b16 %v2084
    %v2585 = vunpack.c.l.b16 %v2085
    %v2586 = vunpack.c.h.b16 %v2085
    %v2587 = vunpack.c.l.b16 %v2086
    %v2588 = vunpack.c.h.b16 %v2086
    %v2589 = vunpack.c.l.b16 %v2087
    %v2590 = vunpack.c.l.b16 %v2088
    %v2591 = vunpack.c.h.b16 %v2088
    %v2592 = vunpack.c.l.b16 %v2089
    %v2593 = vunpack.c.h.b16 %v2089
    %v2594 = vunpack.c.l.b16 %v2090
    %v2595 = vunpack.c.h.b16 %v2090
    %v2596 = vunpack.c.l.b16 %v2091
    %v2597 = vunpack.c.l.b16 %v2092
    %v2598 = vunpack.c.h.b16 %v2092
    %v2599 = vunpack.c.l.b16 %v2093
    %v2600 = vunpack.c.h.b16 %v2093
    %v2601 = vunpack.c.l.b16 %v2094
    %v2602 = vunpack.c.h.b16 %v2094
    %v2603 = vunpack.c.l.b16 %v2095
    %v2604 = vunpack.c.l.b16 %v2096
    %v2605 = vunpack.c.h.b16 %v2096
    %v2606 = vunpack.c.l.b16 %v2097
    %v2607 = vunpack.c.h.b16 %v2097
    %v2608 = vunpack.c.l.b16 %v2098
    %v2609 = vunpack.c.h.b16 %v2098
    %v2610 = vunpack.c.l.b16 %v2099
    %v2611 = vunpack.c.l.b16 %v2100
    %v2612 = vunpack.c.h.b16 %v2100
    %v2613 = vunpack.c.l.b16 %v2101
    %v2614 = vunpack.c.h.b16 %v2101
    %v2615 = vunpack.c.l.b16 %v2102
    %v2616 = vunpack.c.h.b16 %v2102
    %v2617 = vunpack.c.l.b16 %v2103
    %v2618 = vunpack.c.l.b16 %v2104
    %v2619 = vunpack.c.h.b16 %v2104
    %v2620 = vunpack.c.l.b16 %v2105
    %v2621 = vunpack.c.h.b16 %v2105
    %v2622 = vunpack.c.l.b16 %v2106
    %v2623 = vunpack.c.h.b16 %v2106
    %v2624 = vunpack.c.l.b16 %v2107
    %v2625 = vunpack.c.l.b16 %v2108
    %v2626 = vunpack.c.h.b16 %v2108
    %v2627 = vunpack.c.l.b16 %v2109
    %v2628 = vunpack.c.h.b16 %v2109
    %v2629 = vunpack.c.l.b16 %v2110
    %v2630 = vunpack.c.h.b16 %v2110
    %v2631 = vunpack.c.l.b16 %v2111
    %v2632 = vunpack.c.l.b16 %v2112
    %v2633 = vunpack.c.h.b16 %v2112
    %v2634 = vunpack.c.l.b16 %v2113
    %v2635 = vunpack.c.h.b16 %v2113
    %v2636 = vunpack.c.l.b16 %v2114
    %v2637 = vunpack.c.h.b16 %v2114
    %v2638 = vunpack.c.l.b16 %v2115
    %v2639 = vunpack.c.l.b16 %v2116
    %v2640 = vunpack.c.h.b16 %v2116
    %v2641 = vunpack.c.l.b16 %v2117
    %v2642 = vunpack.c.h.b16 %v2117
    %v2643 = vunpack.c.l.b16 %v2118
    %v2644 = vunpack.c.h.b16 %v2118
    %v2645 = vunpack.c.l.b16 %v2119
    %v2646 = vunpack.c.l.b16 %v2120
    %v2647 = vunpack.c.h.b16 %v2120
    %v2648 = vunpack.c.l.b16 %v2121
    %v2649 = vunpack.c.h.b16 %v2121
    %v2650 = vunpack.c.l.b16 %v2122
    %v2651 = vunpack.c.h.b16 %v2122
    %v2652 = vunpack.c.l.b16 %v2123
    %v2653 = vunpack.c.l.b16 %v2124
    %v2654 = vunpack.c.h.b16 %v2124
    %v2655 = vunpack.c.l.b16 %v2125
    %v2656 = vunpack.c.h.b16 %v2125
    %v2657 = vunpack.c.l.b16 %v2126
    %v2658 = vunpack.c.h.b16 %v2126
    %v2659 = vunpack.c.l.b16 %v2127
    %v2660 = vunpack.c.l.b16 %v2128
    %v2661 = vunpack.c.h.b16 %v2128
    %v2662 = vunpack.c.l.b16 %v2129
    %v2663 = vunpack.c.h.b16 %v2129
    %v2664 = vunpack.c.l.b16 %v2130
    %v2665 = vunpack.c.h.b16 %v2130
    %v2666 = vunpack.c.l.b16 %v2131
    %v2667 = vunpack.c.l.b16 %v2132
    %v2668 = vunpack.c.h.b16 %v2132
    %v2669 = vunpack.c.l.b16 %v2133
    %v2670 = vunpack.c.h.b16 %v2133
    %v2671 = vunpack.c.l.b16 %v2134
    %v2672 = vunpack.c.h.b16 %v2134
    %v2673 = vunpack.c.l.b16 %v2135
    %v2674 = vunpack.c.l.b16 %v2136
    %v2675 = vunpack.c.h.b16 %v2136
    %v2676 = vunpack.c.l.b16 %v2137
    %v2677 = vunpack.c.h.b16 %v2137
    %v2678 = vunpack.c.l.b16 %v2138
    %v2679 = vunpack.c.h.b16 %v2138
    %v2680 = vunpack.c.l.b16 %v2139
    %v2681 = vunpack.c.l.b16 %v2140
    %v2682 = vunpack.c.h.b16 %v2140
    %v2683 = vunpack.c.l.b16 %v2141
    %v2684 = vunpack.c.h.b16 %v2141
    %v2685 = vunpack.c.l.b16 %v2142
    %v2686 = vunpack.c.h.b16 %v2142
    %v2687 = vunpack.c.l.b16 %v2143
    %v2688 = vunpack.c.l.b16 %v2144
    %v2689 = vunpack.c.h.b16 %v2144
    %v2690 = vunpack.c.l.b16 %v2145
    %v2691 = vunpack.c.h.b16 %v2145
    %v2692 = vunpack.c.l.b16 %v2146
    %v2693 = vunpack.c.h.b16 %v2146
    %v2694 = vunpack.c.l.b16 %v2147
    %v2695 = vunpack.c.l.b16 %v2148
    %v2696 = vunpack.c.h.b16 %v2148
    %v2697 = vunpack.c.l.b16 %v2149
    %v2698 = vunpack.c.h.b16 %v2149
    %v2699 = vunpack.c.l.b16 %v2150
    %v2700 = vunpack.c.h.b16 %v2150
    %v2701 = vunpack.c.l.b16 %v2151
    %v2702 = vunpack.c.l.b16 %v2152
    %v2703 = vunpack.c.h.b16 %v2152
    %v2704 = vunpack.c.l.b16 %v2153
    %v2705 = vunpack.c.h.b16 %v2153
    %v2706 = vunpack.c.l.b16 %v2154
    %v2707 = vunpack.c.h.b16 %v2154
    %v2708 = vunpack.c.l.b16 %v2155
    %v2709 = vunpack.c.l.b16 %v2156
    %v2710 = vunpack.c.h.b16 %v2156
    %v2711 = vunpack.c.l.b16 %v2157
    %v2712 = vunpack.c.h.b16 %v2157
    %v2713 = vunpack.c.l.b16 %v2158
    %v2714 = vunpack.c.h.b16 %v2158
    %v2715 = vunpack.c.l.b16 %v2159
    %v2716 = vunpack.c.l.b16 %v2160
    %v2717 = vunpack.c.h.b16 %v2160
    %v2718 = vunpack.c.l.b16 %v2161
    %v2719 = vunpack.c.h.b16 %v2161
    %v2720 = vunpack.c.l.b16 %v2162
    %v2721 = vunpack.c.h.b16 %v2162
    %v2722 = vunpack.c.l.b16 %v2163
    %v2723 = vunpack.c.l.b16 %v2164
    %v2724 = vunpack.c.h.b16 %v2164
    %v2725 = vunpack.c.l.b16 %v2165
    %v2726 = vunpack.c.h.b16 %v2165
    %v2727 = vunpack.c.l.b16 %v2166
    %v2728 = vunpack.c.h.b16 %v2166
    %v2729 = vunpack.c.l.b16 %v2167
    %v2730 = vunpack.c.l.b16 %v2168
    %v2731 = vunpack.c.h.b16 %v2168
    %v2732 = vunpack.c.l.b16 %v2169
    %v2733 = vunpack.c.h.b16 %v2169
    %v2734 = vunpack.c.l.b16 %v2170
    %v2735 = vunpack.c.h.b16 %v2170
    %v2736 = vunpack.c.l.b16 %v2171
    %v2737 = vpack.c.b16 %v2408, %v2401
    %v2738 = vpack.c.b16 %v2409, %v2402
    %v2739 = vpack.c.b16 %v2410, %v2403
    %v2740 = vpack.c.b16 %v2411, %v2404
    %v2741 = vpack.c.b16 %v2412, %v2405
    %v2742 = vpack.c.b16 %v2413, %v2406
    %v2743 = vpack.c.b16 %v2414, %v2407
    %v2744 = vpack.c.b16 %v2422, %v2415
    %v2745 = vpack.c.b16 %v2423, %v2416
    %v2746 = vpack.c.b16 %v2424, %v2417
    %v2747 = vpack.c.b16 %v2425, %v2418
    %v2748 = vpack.c.b16 %v2426, %v2419
    %v2749 = vpack.c.b16 %v2427, %v2420
    %v2750 = vpack.c.b16 %v2428, %v2421
    %v2751 = vpack.c.b16 %v2436, %v2429
    %v2752 = vpack.c.b16 %v2437, %v2430
    %v2753 = vpack.c.b16 %v2438, %v2431
    %v2754 = vpack.c.b16 %v2439, %v2432
    %v2755 = vpack.c.b16 %v2440, %v2433
    %v2756 = vpack.c.b16 %v2441, %v2434
    %v2757 = vpack.c.b16 %v2442, %v2435
    %v2758 = vpack.c.b16 %v2450, %v2443
    %v2759 = vpack.c.b16 %v2451, %v2444
    %v2760 = vpack.c.b16 %v2452, %v2445
    %v2761 = vpack.c.b16 %v2453, %v2446
    %v2762 = vpack.c.b16 %v2454, %v2447
    %v2763 = vpack.c.b16 %v2455, %v2448
    %v2764 = vpack.c.b16 %v2456, %v2449
    %v2765 = vpack.c.b16 %v2464, %v2457
    %v2766 = vpack.c.b16 %v2465, %v2458
    %v2767 = vpack.c.b16 %v2466, %v2459
    %v2768 = vpack.c.b16 %v2467, %v2460
    %v2769 = vpack.c.b16 %v2468, %v2461
    %v2770 = vpack.c.b16 %v2469, %v2462
    %v2771 = vpack.c.b16 %v2470, %v2463
    %v2772 = vpack.c.b16 %v2478, %v2471
    %v2773 = vpack.c.b16 %v2479, %v2472
    %v2774 = vpack.c.b16 %v2480, %v2473
    %v2775 = vpack.c.b16 %v2481, %v2474
    %v2776 = vpack.c.b16 %v2482, %v2475
    %v2777 = vpack.c.b16 %v2483, %v2476
    %v2778 = vpack.c.b16 %v2484, %v2477
    %v2779 = vpack.c.b16 %v2492, %v2485
    %v2780 = vpack.c.b16 %v2493, %v2486
    %v2781 = vpack.c.b16 %v2494, %v2487
    %v2782 = vpack.c.b16 %v2495, %v2488
    %v2783 = vpack.c.b16 %v2496, %v2489
    %v2784 = vpack.c.b16 %v2497, %v2490
    %v2785 = vpack.c.b16 %v2498, %v2491
    %v2786 = vpack.c.b16 %v2506, %v2499
    %v2787 = vpack.c.b16 %v2507, %v2500
    %v2788 = vpack.c.b16 %v2508, %v2501
    %v2789 = vpack.c.b16 %v2509, %v2502
    %v2790 = vpack.c.b16 %v2510, %v2503
    %v2791 = vpack.c.b16 %v2511, %v2504
    %v2792 = vpack.c.b16 %v2512, %v2505
    %v2793 = vpack.c.b16 %v2520, %v2513
    %v2794 = vpack.c.b16 %v2521, %v2514
    %v2795 = vpack.c.b16 %v2522, %v2515
    %v2796 = vpack.c.b16 %v2523, %v2516
    %v2797 = vpack.c.b16 %v2524, %v2517
    %v2798 = vpack.c.b16 %v2525, %v2518
    %v2799 = vpack.c.b16 %v2526, %v2519
    %v2800 = vpack.c.b16 %v2534, %v2527
    %v2801 = vpack.c.b16 %v2535, %v2528
    %v2802 = vpack.c.b16 %v2536, %v2529
    %v2803 = vpack.c.b16 %v2537, %v2530
    %v2804 = vpack.c.b16 %v2538, %v2531
    %v2805 = vpack.c.b16 %v2539, %v2532
    %v2806 = vpack.c.b16 %v2540, %v2533
    %v2807 = vpack.c.b16 %v2548, %v2541
    %v2808 = vpack.c.b16 %v2549, %v2542
    %v2809 = vpack.c.b16 %v2550, %v2543
    %v2810 = vpack.c.b16 %v2551, %v2544
    %v2811 = vpack.c.b16 %v2552, %v2545
    %v2812 = vpack.c.b16 %v2553, %v2546
    %v2813 = vpack.c.b16 %v2554, %v2547
    %v2814 = vpack.c.b16 %v2562, %v2555
    %v2815 = vpack.c.b16 %v2563, %v2556
    %v2816 = vpack.c.b16 %v2564, %v2557
    %v2817 = vpack.c.b16 %v2565, %v2558
    %v2818 = vpack.c.b16 %v2566, %v2559
    %v2819 = vpack.c.b16 %v2567, %v2560
    %v2820 = vpack.c.b16 %v2568, %v2561
    %v2821 = vpack.c.b16 %v2576, %v2569
    %v2822 = vpack.c.b16 %v2577, %v2570
    %v2823 = vpack.c.b16 %v2578, %v2571
    %v2824 = vpack.c.b16 %v2579, %v2572
    %v2825 = vpack.c.b16 %v2580, %v2573
    %v2826 = vpack.c.b16 %v2581, %v2574
    %v2827 = vpack.c.b16 %v2582, %v2575
    %v2828 = vpack.c.b16 %v2590, %v2583
    %v2829 = vpack.c.b16 %v2591, %v2584
    %v2830 = vpack.c.b16 %v2592, %v2585
    %v2831 = vpack.c.b16 %v2593, %v2586
    %v2832 = vpack.c.b16 %v2594, %v2587
    %v2833 = vpack.c.b16 %v2595, %v2588
    %v2834 = vpack.c.b16 %v2596, %v2589
    %v2835 = vpack.c.b16 %v2604, %v2597
    %v2836 = vpack.c.b16 %v2605, %v2598
    %v2837 = vpack.c.b16 %v2606, %v2599
    %v2838 = vpack.c.b16 %v2607, %v2600
    %v2839 = vpack.c.b16 %v2608, %v2601
    %v2840 = vpack.c.b16 %v2609, %v2602
    %v2841 = vpack.c.b16 %v2610, %v2603
    %v2842 = vpack.c.b16 %v2618, %v2611
    %v2843 = vpack.c.b16 %v2619, %v2612
    %v2844 = vpack.c.b16 %v2620, %v2613
    %v2845 = vpack.c.b16 %v2621, %v2614
    %v2846 = vpack.c.b16 %v2622, %v2615
    %v2847 = vpack.c.b16 %v2623, %v2616
    %v2848 = vpack.c.b16 %v2624, %v2617
    %v2849 = vpack.c.b16 %v2632, %v2625
    %v2850 = vpack.c.b16 %v2633, %v2626
    %v2851 = vpack.c.b16 %v2634, %v2627
    %v2852 = vpack.c.b16 %v2635, %v2628
    %v2853 = vpack.c.b16 %v2636, %v2629
    %v2854 = vpack.c.b16 %v2637, %v2630
    %v2855 = vpack.c.b16 %v2638, %v2631
    %v2856 = vpack.c.b16 %v2646, %v2639
    %v2857 = vpack.c.b16 %v2647, %v2640
    %v2858 = vpack.c.b16 %v2648, %v2641
    %v2859 = vpack.c.b16 %v2649, %v2642
    %v2860 = vpack.c.b16 %v2650, %v2643
    %v2861 = vpack.c.b16 %v2651, %v2644
    %v2862 = vpack.c.b16 %v2652, %v2645
    %v2863 = vpack.c.b16 %v2660, %v2653
    %v2864 = vpack.c.b16 %v2661, %v2654
    %v2865 = vpack.c.b16 %v2662, %v2655
    %v2866 = vpack.c.b16 %v2663, %v2656
    %v2867 = vpack.c.b16 %v2664, %v2657
    %v2868 = vpack.c.b16 %v2665, %v2658
    %v2869 = vpack.c.b16 %v2666, %v2659
    %v2870 = vpack.c.b16 %v2674, %v2667
    %v2871 = vpack.c.b16 %v2675, %v2668
    %v2872 = vpack.c.b16 %v2676, %v2669
    %v2873 = vpack.c.b16 %v2677, %v2670
    %v2874 = vpack.c.b16 %v2678, %v2671
    %v2875 = vpack.c.b16 %v2679, %v2672
    %v2876 = vpack.c.b16 %v2680, %v2673
    %v2877 = vpack.c.b16 %v2688, %v2681
    %v2878 = vpack.c.b16 %v2689, %v2682
    %v2879 = vpack.c.b16 %v2690, %v2683
    %v2880 = vpack.c.b16 %v2691, %v2684
    %v2881 = vpack.c.b16 %v2692, %v2685
    %v2882 = vpack.c.b16 %v2693, %v2686
    %v2883 = vpack.c.b16 %v2694, %v2687
    %v2884 = vpack.c.b16 %v2702, %v2695
    %v2885 = vpack.c.b16 %v2703, %v2696
    %v2886 = vpack.c.b16 %v2704, %v2697
    %v2887 = vpack.c.b16 %v2705, %v2698
    %v2888 = vpack.c.b16 %v2706, %v2699
    %v2889 = vpack.c.b16 %v2707, %v2700
    %v2890 = vpack.c.b16 %v2708, %v2701
    %v2891 = vpack.c.b16 %v2716, %v2709
    %v2892 = vpack.c.b16 %v2717, %v2710
    %v2893 = vpack.c.b16 %v2718, %v2711
    %v2894 = vpack.c.b16 %v2719, %v2712
    %v2895 = vpack.c.b16 %v2720, %v2713
    %v2896 = vpack.c.b16 %v2721, %v2714
    %v2897 = vpack.c.b16 %v2722, %v2715
    %v2898 = vpack.c.b16 %v2730, %v2723
    %v2899 = vpack.c.b16 %v2731, %v2724
    %v2900 = vpack.c.b16 %v2732, %v2725
    %v2901 = vpack.c.b16 %v2733, %v2726
    %v2902 = vpack.c.b16 %v2734, %v2727
    %v2903 = vpack.c.b16 %v2735, %v2728
    %v2904 = vpack.c.b16 %v2736, %v2729
    %3073 = vmatprep.subr.bf16.mxu0 %v2738
    %3074 = vmatpush1.bf16.msra.mxu0 %v2737
    %3075 = vmatprep.subr.bf16.mxu0 %v2745
    %3076 = vmatpush1.bf16.msra.mxu0 %v2744
    %3077 = vmatprep.subr.bf16.mxu0 %v2752
    %3078 = vmatpush1.bf16.msra.mxu0 %v2751
    %3079 = vmatprep.subr.bf16.mxu0 %v2759
    %3080 = vmatpush1.bf16.msra.mxu0 %v2758
    %3081 = vmatprep.subr.bf16.mxu0 %v2766
    %3082 = vmatpush1.bf16.msra.mxu0 %v2765
    %3083 = vmatprep.subr.bf16.mxu0 %v2773
    %3084 = vmatpush1.bf16.msra.mxu0 %v2772
    %3085 = vmatprep.subr.bf16.mxu0 %v2780
    %3086 = vmatpush1.bf16.msra.mxu0 %v2779
    %3087 = vmatprep.subr.bf16.mxu0 %v2787
    %3088 = vmatpush1.bf16.msra.mxu0 %v2786
    %3089 = vmatprep.subr.bf16.mxu0 %v2794
    %3090 = vmatpush1.bf16.msra.mxu0 %v2793
    %3091 = vmatprep.subr.bf16.mxu0 %v2801
    %3092 = vmatpush1.bf16.msra.mxu0 %v2800
    %3093 = vmatprep.subr.bf16.mxu0 %v2808
    %3094 = vmatpush1.bf16.msra.mxu0 %v2807
    %3095 = vmatprep.subr.bf16.mxu0 %v2815
    %3096 = vmatpush1.bf16.msra.mxu0 %v2814
    %3097 = vmatprep.subr.bf16.mxu0 %v2822
    %3098 = vmatpush1.bf16.msra.mxu0 %v2821
    %3099 = vmatprep.subr.bf16.mxu0 %v2829
    %3100 = vmatpush1.bf16.msra.mxu0 %v2828
    %3101 = vmatprep.subr.bf16.mxu0 %v2836
    %3102 = vmatpush1.bf16.msra.mxu0 %v2835
    %3103 = vmatprep.subr.bf16.mxu0 %v2843
    %3104 = vmatpush1.bf16.msra.mxu0 %v2842
    %3105 = vmatprep.mubr.bf16.mxu0 %v1978
    %3106 = vmatmul.mubr.bf16.gmra.mrb[0].mxu0 %v1977
    %v3107 = vpop.f32.mrb[0].mxu0
    %v3108 = vadd.f32 %v2177, %v3107
    %v3109 = vpop.f32.mrb[0].mxu0
    %v3110 = vadd.f32 %v2181, %v3109
    %v3111 = vpop.f32.mrb[0].mxu0
    %v3112 = vadd.f32 %v2177, %v3111
    %v3113 = vpop.f32.mrb[0].mxu0
    %v3114 = vadd.f32 %v2181, %v3113
    %3115 = vdwg.mxu0
    %3116 = vmatprep.subr.bf16.mxu0 %v2850
    %3117 = vmatpush1.bf16.msra.mxu0 %v2849
    %3118 = vmatprep.subr.bf16.mxu0 %v2857
    %3119 = vmatpush1.bf16.msra.mxu0 %v2856
    %3120 = vmatprep.subr.bf16.mxu0 %v2864
    %3121 = vmatpush1.bf16.msra.mxu0 %v2863
    %3122 = vmatprep.subr.bf16.mxu0 %v2871
    %3123 = vmatpush1.bf16.msra.mxu0 %v2870
    %3124 = vmatprep.subr.bf16.mxu0 %v2878
    %3125 = vmatpush1.bf16.msra.mxu0 %v2877
    %3126 = vmatprep.subr.bf16.mxu0 %v2885
    %3127 = vmatpush1.bf16.msra.mxu0 %v2884
    %3128 = vmatprep.subr.bf16.mxu0 %v2892
    %3129 = vmatpush1.bf16.msra.mxu0 %v2891
    %3130 = vmatprep.subr.bf16.mxu0 %v2899
    %3131 = vmatpush1.bf16.msra.mxu0 %v2898
    %3132 = vmatprep.subr.bf16.mxu0 0
    %3133 = vmatpush1.bf16.msra.mxu0 0
    %3134 = vmatprep.subr.bf16.mxu0 0
    %3135 = vmatpush1.bf16.msra.mxu0 0
    %3136 = vmatprep.subr.bf16.mxu0 0
    %3137 = vmatpush1.bf16.msra.mxu0 0
    %3138 = vmatprep.subr.bf16.mxu0 0
    %3139 = vmatpush1.bf16.msra.mxu0 0
    %3140 = vmatprep.subr.bf16.mxu0 0
    %3141 = vmatpush1.bf16.msra.mxu0 0
    %3142 = vmatprep.subr.bf16.mxu0 0
    %3143 = vmatpush1.bf16.msra.mxu0 0
    %3144 = vmatprep.subr.bf16.mxu0 0
    %3145 = vmatpush1.bf16.msra.mxu0 0
    %3146 = vmatprep.subr.bf16.mxu0 0
    %3147 = vmatpush1.bf16.msra.mxu0 0
    %3148 = vmatprep.mubr.bf16.mxu0 0
    %3149 = vmatmul.mubr.bf16.gmra.mrb[0].mxu0 %v1979
    %v3150 = vpop.f32.mrb[0].mxu0
    %v3151 = vadd.f32 %v3108, %v3150
    %v3152 = vpop.f32.mrb[0].mxu0
    %v3153 = vadd.f32 %v3110, %v3152
    %v3154 = vpop.f32.mrb[0].mxu0
    %v3155 = vadd.f32 %v3112, %v3154
    %v3156 = vpop.f32.mrb[0].mxu0
    %v3157 = vadd.f32 %v3114, %v3156
    %3158 = vdwg.mxu0
    %3159 = vmatprep.subr.bf16.mxu0 %v2740
    %3160 = vmatpush1.bf16.msra.mxu0 %v2739
    %3161 = vmatprep.subr.bf16.mxu0 %v2747
    %3162 = vmatpush1.bf16.msra.mxu0 %v2746
    %3163 = vmatprep.subr.bf16.mxu0 %v2754
    %3164 = vmatpush1.bf16.msra.mxu0 %v2753
    %3165 = vmatprep.subr.bf16.mxu0 %v2761
    %3166 = vmatpush1.bf16.msra.mxu0 %v2760
    %3167 = vmatprep.subr.bf16.mxu0 %v2768
    %3168 = vmatpush1.bf16.msra.mxu0 %v2767
    %3169 = vmatprep.subr.bf16.mxu0 %v2775
    %3170 = vmatpush1.bf16.msra.mxu0 %v2774
    %3171 = vmatprep.subr.bf16.mxu0 %v2782
    %3172 = vmatpush1.bf16.msra.mxu0 %v2781
    %3173 = vmatprep.subr.bf16.mxu0 %v2789
    %3174 = vmatpush1.bf16.msra.mxu0 %v2788
    %3175 = vmatprep.subr.bf16.mxu0 %v2796
    %3176 = vmatpush1.bf16.msra.mxu0 %v2795
    %3177 = vmatprep.subr.bf16.mxu0 %v2803
    %3178 = vmatpush1.bf16.msra.mxu0 %v2802
    %3179 = vmatprep.subr.bf16.mxu0 %v2810
    %3180 = vmatpush1.bf16.msra.mxu0 %v2809
    %3181 = vmatprep.subr.bf16.mxu0 %v2817
    %3182 = vmatpush1.bf16.msra.mxu0 %v2816
    %3183 = vmatprep.subr.bf16.mxu0 %v2824
    %3184 = vmatpush1.bf16.msra.mxu0 %v2823
    %3185 = vmatprep.subr.bf16.mxu0 %v2831
    %3186 = vmatpush1.bf16.msra.mxu0 %v2830
    %3187 = vmatprep.subr.bf16.mxu0 %v2838
    %3188 = vmatpush1.bf16.msra.mxu0 %v2837
    %3189 = vmatprep.subr.bf16.mxu0 %v2845
    %3190 = vmatpush1.bf16.msra.mxu0 %v2844
    %3191 = vmatprep.mubr.bf16.mxu0 %v1978
    %3192 = vmatmul.mubr.bf16.gmra.mrb[0].mxu0 %v1977
    %v3193 = vpop.f32.mrb[0].mxu0
    %v3194 = vadd.f32 %v2185, %v3193
    %v3195 = vpop.f32.mrb[0].mxu0
    %v3196 = vadd.f32 %v2189, %v3195
    %v3197 = vpop.f32.mrb[0].mxu0
    %v3198 = vadd.f32 %v2185, %v3197
    %v3199 = vpop.f32.mrb[0].mxu0
    %v3200 = vadd.f32 %v2189, %v3199
    %3201 = vdwg.mxu0
    %3202 = vmatprep.subr.bf16.mxu0 %v2852
    %3203 = vmatpush1.bf16.msra.mxu0 %v2851
    %3204 = vmatprep.subr.bf16.mxu0 %v2859
    %3205 = vmatpush1.bf16.msra.mxu0 %v2858
    %3206 = vmatprep.subr.bf16.mxu0 %v2866
    %3207 = vmatpush1.bf16.msra.mxu0 %v2865
    %3208 = vmatprep.subr.bf16.mxu0 %v2873
    %3209 = vmatpush1.bf16.msra.mxu0 %v2872
    %3210 = vmatprep.subr.bf16.mxu0 %v2880
    %3211 = vmatpush1.bf16.msra.mxu0 %v2879
    %3212 = vmatprep.subr.bf16.mxu0 %v2887
    %3213 = vmatpush1.bf16.msra.mxu0 %v2886
    %3214 = vmatprep.subr.bf16.mxu0 %v2894
    %3215 = vmatpush1.bf16.msra.mxu0 %v2893
    %3216 = vmatprep.subr.bf16.mxu0 %v2901
    %3217 = vmatpush1.bf16.msra.mxu0 %v2900
    %3218 = vmatprep.subr.bf16.mxu0 0
    %3219 = vmatpush1.bf16.msra.mxu0 0
    %3220 = vmatprep.subr.bf16.mxu0 0
    %3221 = vmatpush1.bf16.msra.mxu0 0
    %3222 = vmatprep.subr.bf16.mxu0 0
    %3223 = vmatpush1.bf16.msra.mxu0 0
    %3224 = vmatprep.subr.bf16.mxu0 0
    %3225 = vmatpush1.bf16.msra.mxu0 0
    %3226 = vmatprep.subr.bf16.mxu0 0
    %3227 = vmatpush1.bf16.msra.mxu0 0
    %3228 = vmatprep.subr.bf16.mxu0 0
    %3229 = vmatpush1.bf16.msra.mxu0 0
    %3230 = vmatprep.subr.bf16.mxu0 0
    %3231 = vmatpush1.bf16.msra.mxu0 0
    %3232 = vmatprep.subr.bf16.mxu0 0
    %3233 = vmatpush1.bf16.msra.mxu0 0
    %3234 = vmatprep.mubr.bf16.mxu0 0
    %3235 = vmatmul.mubr.bf16.gmra.mrb[0].mxu0 %v1979
    %v3236 = vpop.f32.mrb[0].mxu0
    %v3237 = vadd.f32 %v3194, %v3236
    %v3238 = vpop.f32.mrb[0].mxu0
    %v3239 = vadd.f32 %v3196, %v3238
    %v3240 = vpop.f32.mrb[0].mxu0
    %v3241 = vadd.f32 %v3198, %v3240
    %v3242 = vpop.f32.mrb[0].mxu0
    %v3243 = vadd.f32 %v3200, %v3242
    %3244 = vdwg.mxu0
    %3245 = vmatprep.subr.bf16.mxu0 %v2742
    %3246 = vmatpush1.bf16.msra.mxu0 %v2741
    %3247 = vmatprep.subr.bf16.mxu0 %v2749
    %3248 = vmatpush1.bf16.msra.mxu0 %v2748
    %3249 = vmatprep.subr.bf16.mxu0 %v2756
    %3250 = vmatpush1.bf16.msra.mxu0 %v2755
    %3251 = vmatprep.subr.bf16.mxu0 %v2763
    %3252 = vmatpush1.bf16.msra.mxu0 %v2762
    %3253 = vmatprep.subr.bf16.mxu0 %v2770
    %3254 = vmatpush1.bf16.msra.mxu0 %v2769
    %3255 = vmatprep.subr.bf16.mxu0 %v2777
    %3256 = vmatpush1.bf16.msra.mxu0 %v2776
    %3257 = vmatprep.subr.bf16.mxu0 %v2784
    %3258 = vmatpush1.bf16.msra.mxu0 %v2783
    %3259 = vmatprep.subr.bf16.mxu0 %v2791
    %3260 = vmatpush1.bf16.msra.mxu0 %v2790
    %3261 = vmatprep.subr.bf16.mxu0 %v2798
    %3262 = vmatpush1.bf16.msra.mxu0 %v2797
    %3263 = vmatprep.subr.bf16.mxu0 %v2805
    %3264 = vmatpush1.bf16.msra.mxu0 %v2804
    %3265 = vmatprep.subr.bf16.mxu0 %v2812
    %3266 = vmatpush1.bf16.msra.mxu0 %v2811
    %3267 = vmatprep.subr.bf16.mxu0 %v2819
    %3268 = vmatpush1.bf16.msra.mxu0 %v2818
    %3269 = vmatprep.subr.bf16.mxu0 %v2826
    %3270 = vmatpush1.bf16.msra.mxu0 %v2825
    %3271 = vmatprep.subr.bf16.mxu0 %v2833
    %3272 = vmatpush1.bf16.msra.mxu0 %v2832
    %3273 = vmatprep.subr.bf16.mxu0 %v2840
    %3274 = vmatpush1.bf16.msra.mxu0 %v2839
    %3275 = vmatprep.subr.bf16.mxu0 %v2847
    %3276 = vmatpush1.bf16.msra.mxu0 %v2846
    %3277 = vmatprep.mubr.bf16.mxu0 %v1978
    %3278 = vmatmul.mubr.bf16.gmra.mrb[0].mxu0 %v1977
    %v3279 = vpop.f32.mrb[0].mxu0
    %v3280 = vadd.f32 %v2193, %v3279
    %v3281 = vpop.f32.mrb[0].mxu0
    %v3282 = vadd.f32 %v2197, %v3281
    %v3283 = vpop.f32.mrb[0].mxu0
    %v3284 = vadd.f32 %v2193, %v3283
    %v3285 = vpop.f32.mrb[0].mxu0
    %v3286 = vadd.f32 %v2197, %v3285
    %3287 = vdwg.mxu0
    %3288 = vmatprep.subr.bf16.mxu0 %v2854
    %3289 = vmatpush1.bf16.msra.mxu0 %v2853
    %3290 = vmatprep.subr.bf16.mxu0 %v2861
    %3291 = vmatpush1.bf16.msra.mxu0 %v2860
    %3292 = vmatprep.subr.bf16.mxu0 %v2868
    %3293 = vmatpush1.bf16.msra.mxu0 %v2867
    %3294 = vmatprep.subr.bf16.mxu0 %v2875
    %3295 = vmatpush1.bf16.msra.mxu0 %v2874
    %3296 = vmatprep.subr.bf16.mxu0 %v2882
    %3297 = vmatpush1.bf16.msra.mxu0 %v2881
    %3298 = vmatprep.subr.bf16.mxu0 %v2889
    %3299 = vmatpush1.bf16.msra.mxu0 %v2888
    %3300 = vmatprep.subr.bf16.mxu0 %v2896
    %3301 = vmatpush1.bf16.msra.mxu0 %v2895
    %3302 = vmatprep.subr.bf16.mxu0 %v2903
    %3303 = vmatpush1.bf16.msra.mxu0 %v2902
    %3304 = vmatprep.subr.bf16.mxu0 0
    %3305 = vmatpush1.bf16.msra.mxu0 0
    %3306 = vmatprep.subr.bf16.mxu0 0
    %3307 = vmatpush1.bf16.msra.mxu0 0
    %3308 = vmatprep.subr.bf16.mxu0 0
    %3309 = vmatpush1.bf16.msra.mxu0 0
    %3310 = vmatprep.subr.bf16.mxu0 0
    %3311 = vmatpush1.bf16.msra.mxu0 0
    %3312 = vmatprep.subr.bf16.mxu0 0
    %3313 = vmatpush1.bf16.msra.mxu0 0
    %3314 = vmatprep.subr.bf16.mxu0 0
    %3315 = vmatpush1.bf16.msra.mxu0 0
    %3316 = vmatprep.subr.bf16.mxu0 0
    %3317 = vmatpush1.bf16.msra.mxu0 0
    %3318 = vmatprep.subr.bf16.mxu0 0
    %3319 = vmatpush1.bf16.msra.mxu0 0
    %3320 = vmatprep.mubr.bf16.mxu0 0
    %3321 = vmatmul.mubr.bf16.gmra.mrb[0].mxu0 %v1979
    %v3322 = vpop.f32.mrb[0].mxu0
    %v3323 = vadd.f32 %v3280, %v3322
    %v3324 = vpop.f32.mrb[0].mxu0
    %v3325 = vadd.f32 %v3282, %v3324
    %v3326 = vpop.f32.mrb[0].mxu0
    %v3327 = vadd.f32 %v3284, %v3326
    %v3328 = vpop.f32.mrb[0].mxu0
    %v3329 = vadd.f32 %v3286, %v3328
    %3330 = vdwg.mxu0
    %3331 = vmatprep.subr.bf16.mxu0 0
    %3332 = vmatpush1.bf16.msra.mxu0 %v2743
    %3333 = vmatprep.subr.bf16.mxu0 0
    %3334 = vmatpush1.bf16.msra.mxu0 %v2750
    %3335 = vmatprep.subr.bf16.mxu0 0
    %3336 = vmatpush1.bf16.msra.mxu0 %v2757
    %3337 = vmatprep.subr.bf16.mxu0 0
    %3338 = vmatpush1.bf16.msra.mxu0 %v2764
    %3339 = vmatprep.subr.bf16.mxu0 0
    %3340 = vmatpush1.bf16.msra.mxu0 %v2771
    %3341 = vmatprep.subr.bf16.mxu0 0
    %3342 = vmatpush1.bf16.msra.mxu0 %v2778
    %3343 = vmatprep.subr.bf16.mxu0 0
    %3344 = vmatpush1.bf16.msra.mxu0 %v2785
    %3345 = vmatprep.subr.bf16.mxu0 0
    %3346 = vmatpush1.bf16.msra.mxu0 %v2792
    %3347 = vmatprep.subr.bf16.mxu0 0
    %3348 = vmatpush1.bf16.msra.mxu0 %v2799
    %3349 = vmatprep.subr.bf16.mxu0 0
    %3350 = vmatpush1.bf16.msra.mxu0 %v2806
    %3351 = vmatprep.subr.bf16.mxu0 0
    %3352 = vmatpush1.bf16.msra.mxu0 %v2813
    %3353 = vmatprep.subr.bf16.mxu0 0
    %3354 = vmatpush1.bf16.msra.mxu0 %v2820
    %3355 = vmatprep.subr.bf16.mxu0 0
    %3356 = vmatpush1.bf16.msra.mxu0 %v2827
    %3357 = vmatprep.subr.bf16.mxu0 0
    %3358 = vmatpush1.bf16.msra.mxu0 %v2834
    %3359 = vmatprep.subr.bf16.mxu0 0
    %3360 = vmatpush1.bf16.msra.mxu0 %v2841
    %3361 = vmatprep.subr.bf16.mxu0 0
    %3362 = vmatpush1.bf16.msra.mxu0 %v2848
    %3363 = vmatprep.mubr.bf16.mxu0 %v1978
    %3364 = vmatmul.mubr.bf16.gmra.mrb[0].mxu0 %v1977
    %v3365 = vpop.f32.mrb[0].mxu0
    %v3366 = vadd.f32 %v2201, %v3365
    %v3367 = vpop.f32.mrb[0].mxu0
    %v3368 = vpop.f32.mrb[0].mxu0
    %v3369 = vadd.f32 %v2201, %v3368
    %v3370 = vpop.f32.mrb[0].mxu0
    %3371 = vdwg.mxu0
    %3372 = vmatprep.subr.bf16.mxu0 0
    %3373 = vmatpush1.bf16.msra.mxu0 %v2855
    %3374 = vmatprep.subr.bf16.mxu0 0
    %3375 = vmatpush1.bf16.msra.mxu0 %v2862
    %3376 = vmatprep.subr.bf16.mxu0 0
    %3377 = vmatpush1.bf16.msra.mxu0 %v2869
    %3378 = vmatprep.subr.bf16.mxu0 0
    %3379 = vmatpush1.bf16.msra.mxu0 %v2876
    %3380 = vmatprep.subr.bf16.mxu0 0
    %3381 = vmatpush1.bf16.msra.mxu0 %v2883
    %3382 = vmatprep.subr.bf16.mxu0 0
    %3383 = vmatpush1.bf16.msra.mxu0 %v2890
    %3384 = vmatprep.subr.bf16.mxu0 0
    %3385 = vmatpush1.bf16.msra.mxu0 %v2897
    %3386 = vmatprep.subr.bf16.mxu0 0
    %3387 = vmatpush1.bf16.msra.mxu0 %v2904
    %3388 = vmatprep.subr.bf16.mxu0 0
    %3389 = vmatpush1.bf16.msra.mxu0 0
    %3390 = vmatprep.subr.bf16.mxu0 0
    %3391 = vmatpush1.bf16.msra.mxu0 0
    %3392 = vmatprep.subr.bf16.mxu0 0
    %3393 = vmatpush1.bf16.msra.mxu0 0
    %3394 = vmatprep.subr.bf16.mxu0 0
    %3395 = vmatpush1.bf16.msra.mxu0 0
    %3396 = vmatprep.subr.bf16.mxu0 0
    %3397 = vmatpush1.bf16.msra.mxu0 0
    %3398 = vmatprep.subr.bf16.mxu0 0
    %3399 = vmatpush1.bf16.msra.mxu0 0
    %3400 = vmatprep.subr.bf16.mxu0 0
    %3401 = vmatpush1.bf16.msra.mxu0 0
    %3402 = vmatprep.subr.bf16.mxu0 0
    %3403 = vmatpush1.bf16.msra.mxu0 0
    %3404 = vmatprep.mubr.bf16.mxu0 0
    %3405 = vmatmul.mubr.bf16.gmra.mrb[0].mxu0 %v1979
    %v3406 = vpop.f32.mrb[0].mxu0
    %v3407 = vadd.f32 %v3366, %v3406
    %v3408 = vpop.f32.mrb[0].mxu0
    %v3409 = vpop.f32.mrb[0].mxu0
    %v3410 = vadd.f32 %v3369, %v3409
    %v3411 = vpop.f32.mrb[0].mxu0
    %3412 = vdwg.mxu0
    %v3413 = vxor.u32 %v3151, 2147483648
    %v3414 = vxor.u32 %v3153, 2147483648
    %v3415 = vxor.u32 %v3237, 2147483648
    %v3416 = vxor.u32 %v3239, 2147483648
    %v3417 = vxor.u32 %v3323, 2147483648
    %v3418 = vxor.u32 %v3325, 2147483648
    %v3419 = vxor.u32 %v3407, 2147483648
    %v3420 = vxor.u32 %v3155, 2147483648
    %v3421 = vxor.u32 %v3157, 2147483648
    %v3422 = vxor.u32 %v3241, 2147483648
    %v3423 = vxor.u32 %v3243, 2147483648
    %v3424 = vxor.u32 %v3327, 2147483648
    %v3425 = vxor.u32 %v3329, 2147483648
    %v3426 = vxor.u32 %v3410, 2147483648
    %v3427 = vmul.f32 %v3413, 1.442695
    %v3428 = vpow.pop %v3427
    %v3429 = vmul.f32 %v3414, 1.442695
    %v3430 = vpow.pop %v3429
    %v3431 = vmul.f32 %v3415, 1.442695
    %v3432 = vpow.pop %v3431
    %v3433 = vmul.f32 %v3416, 1.442695
    %v3434 = vpow.pop %v3433
    %v3435 = vmul.f32 %v3417, 1.442695
    %v3436 = vpow.pop %v3435
    %v3437 = vmul.f32 %v3418, 1.442695
    %v3438 = vpow.pop %v3437
    %v3439 = vmul.f32 %v3419, 1.442695
    %v3440 = vpow.pop %v3439
    %v3441 = vmul.f32 %v3420, 1.442695
    %v3442 = vpow.pop %v3441
    %v3443 = vmul.f32 %v3421, 1.442695
    %v3444 = vpow.pop %v3443
    %v3445 = vmul.f32 %v3422, 1.442695
    %v3446 = vpow.pop %v3445
    %v3447 = vmul.f32 %v3423, 1.442695
    %v3448 = vpow.pop %v3447
    %v3449 = vmul.f32 %v3424, 1.442695
    %v3450 = vpow.pop %v3449
    %v3451 = vmul.f32 %v3425, 1.442695
    %v3452 = vpow.pop %v3451
    %v3453 = vmul.f32 %v3426, 1.442695
    %v3454 = vpow.pop %v3453
    %v3455 = vadd.f32 %v3428, 1.0
    %v3456 = vadd.f32 %v3430, 1.0
    %v3457 = vadd.f32 %v3432, 1.0
    %v3458 = vadd.f32 %v3434, 1.0
    %v3459 = vadd.f32 %v3436, 1.0
    %v3460 = vadd.f32 %v3438, 1.0
    %v3461 = vadd.f32 %v3440, 1.0
    %v3462 = vadd.f32 %v3442, 1.0
    %v3463 = vadd.f32 %v3444, 1.0
    %v3464 = vadd.f32 %v3446, 1.0
    %v3465 = vadd.f32 %v3448, 1.0
    %v3466 = vadd.f32 %v3450, 1.0
    %v3467 = vadd.f32 %v3452, 1.0
    %v3468 = vadd.f32 %v3454, 1.0
    %v3469 = vrcp.pop %v3455
    %v3470 = vmul.f32 1.0, %v3469
    %v3471 = vrcp.pop %v3456
    %v3472 = vmul.f32 1.0, %v3471
    %v3473 = vrcp.pop %v3457
    %v3474 = vmul.f32 1.0, %v3473
    %v3475 = vrcp.pop %v3458
    %v3476 = vmul.f32 1.0, %v3475
    %v3477 = vrcp.pop %v3459
    %v3478 = vmul.f32 1.0, %v3477
    %v3479 = vrcp.pop %v3460
    %v3480 = vmul.f32 1.0, %v3479
    %v3481 = vrcp.pop %v3461
    %v3482 = vmul.f32 1.0, %v3481
    %v3483 = vrcp.pop %v3462
    %v3484 = vmul.f32 1.0, %v3483
    %v3485 = vrcp.pop %v3463
    %v3486 = vmul.f32 1.0, %v3485
    %v3487 = vrcp.pop %v3464
    %v3488 = vmul.f32 1.0, %v3487
    %v3489 = vrcp.pop %v3465
    %v3490 = vmul.f32 1.0, %v3489
    %v3491 = vrcp.pop %v3466
    %v3492 = vmul.f32 1.0, %v3491
    %v3493 = vrcp.pop %v3467
    %v3494 = vmul.f32 1.0, %v3493
    %v3495 = vrcp.pop %v3468
    %v3496 = vmul.f32 1.0, %v3495
    %v3498 = vunpack.c.l.b16 %v1709
    %v3499 = vunpack.c.h.b16 %v1709
    %v3500 = vpack.c.b16 %v3498, %v3498
    %v3501 = vpack.c.b16 %v3499, %v3499
    %3504 = vst [vmem:[#allocation2] sm:$0xf] %v3500
    %3505 = vst [vmem:[#allocation2 + $0x4] sm:$0xf] %v3501
    %v3506 = vpack.c.bf16 %v3484, %v3470
    %v3507 = vpack.c.bf16 %v3486, %v3472
    %v3508 = vpack.c.bf16 %v3488, %v3474
    %v3509 = vpack.c.bf16 %v3490, %v3476
    %v3510 = vpack.c.bf16 %v3492, %v3478
    %v3511 = vpack.c.bf16 %v3494, %v3480
    %v3512 = vpack.c.bf16 %v3496, %v3482
    %v3520 = vunpack.c.l.b16 %v3506
    %v3521 = vunpack.c.l.b16 %v3507
    %v3522 = vunpack.c.l.b16 %v3508
    %v3523 = vunpack.c.l.b16 %v3509
    %v3524 = vunpack.c.l.b16 %v3510
    %v3525 = vunpack.c.l.b16 %v3511
    %v3526 = vunpack.c.l.b16 %v3512
    %v3527 = vunpack.c.h.b16 %v3506
    %v3528 = vunpack.c.h.b16 %v3507
    %v3529 = vunpack.c.h.b16 %v3508
    %v3530 = vunpack.c.h.b16 %v3509
    %v3531 = vunpack.c.h.b16 %v3510
    %v3532 = vunpack.c.h.b16 %v3511
    %v3533 = vunpack.c.h.b16 %v3512
    %v3534 = vpack.c.b16 %v3521, %v3520
    %v3535 = vpack.c.b16 %v3523, %v3522
    %v3536 = vpack.c.b16 %v3525, %v3524
    %v3537 = vpack.c.b16 %v3526, %v3526
    %v3538 = vpack.c.b16 %v3528, %v3527
    %v3539 = vpack.c.b16 %v3530, %v3529
    %v3540 = vpack.c.b16 %v3532, %v3531
    %v3541 = vpack.c.b16 %v3533, %v3533
    %3550 = vst [vmem:[#allocation4] sm:$0xff] %v3534
    %3551 = vst [vmem:[#allocation4 + $0x8] sm:$0xff] %v3535
    %3552 = vst [vmem:[#allocation4 + $0x10] sm:$0xff] %v3536
    %vm3553 = vcmask 125952
    %3554 = vst.msk [vmem:[#allocation4 + $0x18] sm:$0xf] %vm3553, %v3537
    %3555 = vst [vmem:[#allocation4 + $0x1c] sm:$0xff] %v3538
    %3556 = vst [vmem:[#allocation4 + $0x24] sm:$0xff] %v3539
    %3557 = vst [vmem:[#allocation4 + $0x2c] sm:$0xff] %v3540
    %3558 = vst.msk [vmem:[#allocation4 + $0x34] sm:$0xf] %vm3553, %v3541
    // Predicated region
    $region38: #{tpu_custom_call.1} parent=1 // pred_check
      _
    $region39: #{tpu_custom_call.1} parent=1 // pred_check_branch
      %3560 = sbr.rel (0) target = $region41
    $region40: #{tpu_custom_call.1} parent=1 // pred_region
      %s3562 = ssub.s32 128, 128
      %3563 = vsyncadd [#allocation3], %s3562
      %s3564 = sshll.u32 [#allocation2], 4
      %s3565 = int_to_ptr.vmem [resolvable:$true] %s3564
      %3570 = dma.vmem_to_hbm [thread:$0]  %s3565, 128, %s9, [#allocation3], 64, 64, 4
    $region41: #{tpu_custom_call.1} parent=1 // pred_fallthru
      _
    // Predicated region
    $region42: #{tpu_custom_call.1} parent=1 // pred_check
      _
    $region43: #{tpu_custom_call.1} parent=1 // pred_check_branch
      %3572 = sbr.rel (0) target = $region45
    $region44: #{tpu_custom_call.1} parent=1 // pred_region
      %s3574 = ssub.s32 896, 896
      %3575 = vsyncadd [#allocation5], %s3574
      %s3576 = sshll.u32 [#allocation4], 4
      %s3577 = int_to_ptr.vmem [resolvable:$true] %s3576
      %3582 = dma.vmem_to_hbm [thread:$0]  %s3577, 896, %s10, [#allocation5], 448, 448, 28
    $region45: #{tpu_custom_call.1} parent=1 // pred_fallthru
      _
    // Predicated region
    $region46: #{tpu_custom_call.1} parent=1 // pred_check
      _
    $region47: #{tpu_custom_call.1} parent=1 // pred_check_branch
      %3584 = sbr.rel (0) target = $region49
    $region48: #{tpu_custom_call.1} parent=1 // pred_region
      %3585 = dma.done [#allocation3], 128
    $region49: #{tpu_custom_call.1} parent=1 // pred_fallthru
      _
    // Predicated region
    $region50: #{tpu_custom_call.1} parent=1 // pred_check
      _
    $region51: #{tpu_custom_call.1} parent=1 // pred_check_branch
      %3587 = sbr.rel (0) target = $region53
    $region52: #{tpu_custom_call.1} parent=1 // pred_region
      %3588 = dma.done [#allocation5], 896
    $region53: #{tpu_custom_call.1} parent=1 // pred_fallthru
      _
    %3589 = vsyncpa [#allocation3], 1
    %3590 = vsyncpa [#allocation5], 1

</llo_original>
